<compile_context>
chip_gen: v6e
topology: v6e:2x2x1
jax: 0.10.0
libtpu: 0.0.40
codegen_flags: <defaults>
</compile_context>

<pallas_src>
import functools

import jax
import jax.numpy as jnp
from jax.experimental import pallas as pl
from jax.experimental.pallas import tpu as pltpu


RHO_LOSS = 8.0       # iSogCLR_TempNet_Loss.rho
RHO_TG = 8.0         # TempGenerator rho (the loss forwards its own rho)
TAU_MIN_TG = 0.001   # TempGenerator default tau_min
EPS = 1e-14          # loss eps
NEG_HUGE = -1.0e30

_CDIMS = (((1,), (1,)), ((), ()))  # contract last dims of both operands (A @ B.T)


def _sigmoid(x):
    # Numerically stable sigmoid via EUP tanh.
    return 0.5 * (jnp.tanh(0.5 * x) + 1.0)


def _temp_gen(x_bf16, proj_w_bf16, proj_b, protos_bf16, inv_exp_scaler,
              l1_b, l1_w, l2_w, M):
    """TempGenerator.forward (eval-mode), bf16 MXU operands, f32 accumulation."""
    f32 = jnp.float32
    bf16 = jnp.bfloat16
    # nn.Linear: y = x @ W.T + b   (contract last dims => no in-kernel transpose)
    y = jax.lax.dot_general(x_bf16, proj_w_bf16, _CDIMS,
                            preferred_element_type=f32) + proj_b
    h = _sigmoid(y)
    # TODO(synk): nn.Dropout(0.5) in training mode omitted (eval-mode semantics).
    # One MXU pass reused for both heads; prototypes arrive pre-normalized (bf16).
    dots = jax.lax.dot_general(h.astype(bf16), protos_bf16, _CDIMS,
                               preferred_element_type=f32)            # (n, M)
    logits = dots * inv_exp_scaler      # == (x / exp(scaler)) @ P.T
    logits = logits - jnp.max(logits, axis=1, keepdims=True)
    e = jnp.exp(logits)
    weights = e * pl.reciprocal(jnp.sum(e, axis=1, keepdims=True), approx=True)
    sims = _sigmoid(dots)
    t1 = jnp.sum(weights * sims * l1_w, axis=1) + l1_b                # (n,)
    t2 = jnp.sum(sims * l2_w, axis=1) * (1.0 / float(M))              # (n,)
    return jnp.maximum((t1 - t2) * (1.0 / RHO_TG), TAU_MIN_TG)        # (n,)


def _loss_kernel(B, M, D, TM,
                 scal_ref, img_ref, txt_ref,
                 img_pw_ref, img_pr_ref, txt_pw_ref, txt_pr_ref,
                 vec_ref, diag_ref,
                 img_out_ref, txt_out_ref,
                 tau_sc, acc_sc):
    f32 = jnp.float32
    r = pl.program_id(0)
    n_r = pl.num_programs(0)

    # Scalars from SMEM (exp(-scaler) precomputed in the wrapper).
    i_escaler = scal_ref[0]
    i_l1b = scal_ref[1]
    t_escaler = scal_ref[2]
    t_l1b = scal_ref[3]

    # Packed small vectors: rows = [i_pb, i_l1w, i_l2w, t_pb, t_l1w, t_l2w].
    i_pb = vec_ref[0:1, :D]
    i_l1w = vec_ref[1:2, :M]
    i_l2w = vec_ref[2:3, :M]
    t_pb = vec_ref[3:4, :D]
    t_l1w = vec_ref[4:5, :M]
    t_l2w = vec_ref[5:6, :M]

    txt_all = txt_ref[...]      # (B, D) bf16, resident across the grid
    img_tile = img_ref[...]     # (TM, D) bf16, pipelined per row tile

    # --- first grid step only: text-side tau and column-accumulator init ---
    @pl.when(r == 0)
    def _():
        tau_t = _temp_gen(txt_all, txt_pw_ref[...], t_pb, txt_pr_ref[...],
                          t_escaler, t_l1b, t_l1w, t_l2w, M)          # (B,)
        tau_sc[0, :] = tau_t
        tau_sc[1, :] = 1.0 / tau_t          # exact divide (tau can be 1e-3)
        acc_sc[0, :] = jnp.full((B,), NEG_HUGE, f32)   # running column max
        acc_sc[1, :] = jnp.zeros((B,), f32)            # running sum exp
        acc_sc[2, :] = jnp.zeros((B,), f32)            # running sum exp * tdt

    # --- shared similarity tile on the MXU (bf16 operands, f32 accumulate) ---
    sim = jax.lax.dot_general(img_tile, txt_all, _CDIMS,
                              preferred_element_type=f32)             # (TM, B)

    row_g = r * TM + jax.lax.broadcasted_iota(jnp.int32, (TM, B), 0)
    col = jax.lax.broadcasted_iota(jnp.int32, (TM, B), 1)
    dmask = col == row_g

    # Diagonal of sim for this row tile, extracted from sim itself -> exact
    # cancellation on the image side.
    diag_rows = jnp.sum(jnp.where(dmask, sim, 0.0), axis=1)           # (TM,)

    # ------------- image (row) side: fully sequenced before text side -------------
    tau_img = _temp_gen(img_tile, img_pw_ref[...], i_pb, img_pr_ref[...],
                        i_escaler, i_l1b, i_l1w, i_l2w, M)            # (TM,)
    inv_tau_img = 1.0 / tau_img
    idt = (sim - diag_rows[:, None]) * inv_tau_img[:, None]
    idt = jnp.where(dmask, 0.0, idt)          # diagonal exactly 0 (reference)
    m_I = jnp.max(idt, axis=1)                # includes the diagonal 0
    e_i = jnp.where(dmask, 0.0, jnp.exp(idt - m_I[:, None]))
    g_Ip = jnp.sum(e_i, axis=1)               # sum exp(idt - m_I), diag masked
    p_Ip = jnp.sum(e_i * idt, axis=1)         # sum exp(idt - m_I) * idt
    # Single dense store of the per-row results for this tile.
    img_out_ref[...] = jnp.concatenate(
        [tau_img[None, :], m_I[None, :], g_Ip[None, :], p_Ip[None, :]], axis=0)

    # ------------- text (column) side: online-rescaled accumulators -------------
    inv_tau_txt = tau_sc[1:2, :]                                      # (1, B)
    tdt = (sim - diag_ref[...]) * inv_tau_txt
    tdt = jnp.where(dmask, 0.0, tdt)
    m_old = acc_sc[0:1, :]
    m_new = jnp.maximum(m_old, jnp.max(tdt, axis=0, keepdims=True))
    c = jnp.exp(m_old - m_new)
    e_t = jnp.where(dmask, 0.0, jnp.exp(tdt - m_new))
    acc_sc[0:1, :] = m_new
    acc_sc[1:2, :] = acc_sc[1:2, :] * c + jnp.sum(e_t, axis=0, keepdims=True)
    acc_sc[2:3, :] = acc_sc[2:3, :] * c + jnp.sum(e_t * tdt, axis=0, keepdims=True)

    @pl.when(r == n_r - 1)
    def _():
        # Single dense store of the per-column results.
        txt_out_ref[...] = jnp.concatenate(
            [tau_sc[0:1, :], acc_sc[0:1, :], acc_sc[1:2, :], acc_sc[2:3, :]],
            axis=0)


def make_temp_gen_params(key, feature_dim, M):
    """Deterministic parameter init mirroring TempGenerator.__init__ shapes."""
    k1, k2, k3 = jax.random.split(key, 3)
    bound = 1.0 / (feature_dim ** 0.5)
    return dict(
        proj_w=jax.random.uniform(k1, (feature_dim, feature_dim), jnp.float32, -bound, bound),
        proj_b=jax.random.uniform(k2, (1, feature_dim), jnp.float32, -bound, bound),
        prototypes=jax.random.normal(k3, (M, feature_dim), jnp.float32),
        scaler=jnp.full((1, 1), jnp.log(0.01), jnp.float32),
        l1_w=jnp.ones((1, M), jnp.float32),
        l1_b=jnp.zeros((1, 1), jnp.float32),
        l2_w=jnp.ones((1, M), jnp.float32),
    )


def _normalize_rows(p):
    # F.normalize(p=2, dim=1): x / max(||x||, eps)
    p = jnp.asarray(p, jnp.float32)
    inv = jax.lax.rsqrt(jnp.maximum(jnp.sum(p * p, axis=1, keepdims=True), 1e-24))
    return p * inv


def _pick_row_tile(B):
    if B <= 256:
        return B
    for t in (512, 256, 128):
        if B % t == 0:
            return t
    return B


def _vmem_limit_bytes():
    cap = 128 * 1024 * 1024
    try:
        info = pltpu.get_tpu_info()
        cap = int(getattr(info, "vmem_capacity_bytes", cap))
    except Exception:
        pass
    # ~100 MiB on 128-MiB parts (v5e/v6e), ~51 MiB on 64-MiB parts (v7x).
    return max(32 * 1024 * 1024, min(int(cap * 0.8), 100 * 1024 * 1024))


def isogclr_tempnet_loss(image_features, text_features, image_ids, text_ids,
                         epoch, state, img_params, txt_params, gamma=1.0):
    """Functional equivalent of iSogCLR_TempNet_Loss.forward (world_size == 1).

    Returns ((clip_loss, temp_loss), tau_image, tau_text, diag_sim), new_state.
    NOTE: the scatter back into the state buffers is order-dependent if image_ids /
    text_ids contain duplicates (same caveat as the PyTorch reference).
    """
    b_I_buf, b_T_buf, s_I_buf, s_T_buf = state
    B, D = image_features.shape
    M = img_params["prototypes"].shape[0]
    P = max(D, M)
    TM = _pick_row_tile(B)
    grid = (B // TM,)

    f32 = jnp.float32
    bf16 = jnp.bfloat16

    img_b = image_features.astype(bf16)
    txt_b = text_features.astype(bf16)

    # Diagonal of sim (returned to the caller; used in-kernel only for the
    # text/column diffs -- the image/row diffs use the exact MXU diagonal).
    diag = jnp.sum(img_b.astype(f32) * txt_b.astype(f32), axis=1)     # (B,)

    def _row(v, width):
        v = jnp.asarray(v, f32).reshape(1, -1)
        return jnp.pad(v, ((0, 0), (0, width - v.shape[1])))

    # Packed small vectors: rows = [i_pb, i_l1w, i_l2w, t_pb, t_l1w, t_l2w].
    vec_pack = jnp.concatenate([
        _row(img_params["proj_b"], P), _row(img_params["l1_w"], P),
        _row(img_params["l2_w"], P), _row(txt_params["proj_b"], P),
        _row(txt_params["l1_w"], P), _row(txt_params["l2_w"], P)], axis=0)

    def _scalar(v):
        return jnp.asarray(v, f32).reshape(())

    # exp(-scaler) precomputed here; true scalars go to SMEM.
    scalars = jnp.stack([
        jnp.exp(-_scalar(img_params["scaler"])), _scalar(img_params["l1_b"]),
        jnp.exp(-_scalar(txt_params["scaler"])), _scalar(txt_params["l1_b"])])

    # bf16 weights; prototypes pre-normalized (batch-independent work kept off-chip).
    img_proj_w = jnp.asarray(img_params["proj_w"], f32).astype(bf16)
    txt_proj_w = jnp.asarray(txt_params["proj_w"], f32).astype(bf16)
    img_protos = _normalize_rows(img_params["prototypes"]).astype(bf16)
    txt_protos = _normalize_rows(txt_params["prototypes"]).astype(bf16)

    kernel = functools.partial(_loss_kernel, B, M, D, TM)

    grid_spec = pltpu.PrefetchScalarGridSpec(
        num_scalar_prefetch=0,
        grid=grid,
        in_specs=[
            pl.BlockSpec(memory_space=pltpu.MemorySpace.SMEM),     # scalars
            pl.BlockSpec((TM, D), lambda r: (r, 0)),               # image feats (tiled)
            pl.BlockSpec((B, D), lambda r: (0, 0)),                # text feats (resident)
            pl.BlockSpec((D, D), lambda r: (0, 0)),                # img proj_w (bf16)
            pl.BlockSpec((M, D), lambda r: (0, 0)),                # img prototypes (bf16)
            pl.BlockSpec((D, D), lambda r: (0, 0)),                # txt proj_w (bf16)
            pl.BlockSpec((M, D), lambda r: (0, 0)),                # txt prototypes (bf16)
            pl.BlockSpec((6, P), lambda r: (0, 0)),                # packed small vectors
            pl.BlockSpec((1, B), lambda r: (0, 0)),                # diag (columns)
        ],
        out_specs=[
            pl.BlockSpec((4, TM), lambda r: (0, r)),               # per-row results
            pl.BlockSpec((4, B), lambda r: (0, 0)),                # per-column results
        ],
        scratch_shapes=[
            pltpu.VMEM((2, B), f32),   # [tau_text ; 1/tau_text]
            pltpu.VMEM((3, B), f32),   # column accumulators [m ; sum exp ; sum exp*tdt]
        ],
    )

    img_out, txt_out = pl.pallas_call(
        kernel,
        out_shape=(jax.ShapeDtypeStruct((4, B), f32),
                   jax.ShapeDtypeStruct((4, B), f32)),
        grid_spec=grid_spec,
        compiler_params=pltpu.CompilerParams(
            dimension_semantics=("arbitrary",),
            vmem_limit_bytes=_vmem_limit_bytes()),
    )(scalars, img_b, txt_b, img_proj_w, img_protos, txt_proj_w, txt_protos,
      vec_pack, diag.reshape(1, B))

    tau_image, m_I, g_Ip, p_Ip = img_out[0], img_out[1], img_out[2], img_out[3]
    tau_text, m_T, l_T, p_T = txt_out[0], txt_out[1], txt_out[2], txt_out[3]

    # ---- O(B) finalization in plain JAX (exact f32 math, no recompiles) ----
    old_b_I = b_I_buf[image_ids]
    old_b_T = b_T_buf[text_ids]
    old_s_I = s_I_buf[image_ids]
    old_s_T = s_T_buf[text_ids]

    b_I = jnp.maximum(m_I, old_b_I)
    b_T = jnp.maximum(m_T, old_b_T)
    scale_I = jnp.exp(m_I - b_I)
    scale_T = jnp.exp(m_T - b_T)
    g_I = g_Ip * scale_I
    g_T = l_T * scale_T
    sum_exp_idt = p_Ip * scale_I
    sum_exp_tdt = p_T * scale_T

    gamma = jnp.asarray(gamma, f32)
    is_first = jnp.asarray(epoch) == 0
    s_I_ema = (1.0 - gamma) * old_s_I * jnp.exp(old_b_I - b_I) + gamma * g_I
    s_T_ema = (1.0 - gamma) * old_s_T * jnp.exp(old_b_T - b_T) + gamma * g_T
    s_I = jnp.where(is_first, g_I, s_I_ema)
    s_T = jnp.where(is_first, g_T, s_T_ema)

    s_I_c = jnp.maximum(s_I, EPS)
    s_T_c = jnp.maximum(s_T, EPS)

    sum_w_idt = sum_exp_idt / s_I_c     # == sum(weights_image * image_diffs_d_temps)
    sum_w_tdt = sum_exp_tdt / s_T_c
    image_loss = tau_image * sum_w_idt  # image_diffs = idt * tau_image (row constant)
    text_loss = tau_text * sum_w_tdt
    clip_loss = jnp.mean(image_loss) + jnp.mean(text_loss)

    temp_w_i = jnp.log(s_I_c / (B - 1)) + b_I + RHO_LOSS - sum_w_idt
    temp_w_t = jnp.log(s_T_c / (B - 1)) + b_T + RHO_LOSS - sum_w_tdt
    temp_loss = jnp.mean(temp_w_i * tau_image) + jnp.mean(temp_w_t * tau_text)

    # State scatter (pre-clamp s, like the reference); order-dependent on dup ids.
    new_state = (b_I_buf.at[image_ids].set(b_I),
                 b_T_buf.at[text_ids].set(b_T),
                 s_I_buf.at[image_ids].set(s_I),
                 s_T_buf.at[text_ids].set(s_T))

    return ((clip_loss, temp_loss), tau_image, tau_text, diag), new_state


if __name__ == "__main__":
    key = jax.random.PRNGKey(0)
    B, D = 32, 128        # batch (== bsz == M of TempGenerator), feature_dim
    M = B
    N = 128               # size of per-sample state buffers (synthetic, small)

    k_img, k_txt, k_ig, k_tg = jax.random.split(key, 4)
    image_features = jax.random.normal(k_img, (B, D), jnp.float32)
    image_features = image_features / jnp.linalg.norm(image_features, axis=1, keepdims=True)
    text_features = jax.random.normal(k_txt, (B, D), jnp.float32)
    text_features = text_features / jnp.linalg.norm(text_features, axis=1, keepdims=True)

    image_ids = jnp.arange(B, dtype=jnp.int32)
    text_ids = jnp.arange(B, dtype=jnp.int32) + B

    img_params = make_temp_gen_params(k_ig, D, M)
    txt_params = make_temp_gen_params(k_tg, D, M)

    state = tuple(jnp.zeros((N,), jnp.float32) for _ in range(4))

    loss_fn = jax.jit(isogclr_tempnet_loss)
    (losses, tau_image, tau_text, diag_sim), state = loss_fn(
        image_features, text_features, image_ids, text_ids,
        0, state, img_params, txt_params, 1.0)

    jax.block_until_ready((losses, tau_image, tau_text, diag_sim, state))
    print("KERNEL_OK")
</pallas_src>

<mosaic_0001>
module attributes {stable_mosaic.version = 11 : i64} {
  func.func @_loss_kernel(%arg0: i32, %arg1: memref<4xf32, #tpu.memory_space<smem>>, %arg2: memref<32x128xbf16, #tpu.memory_space<vmem>>, %arg3: memref<32x128xbf16, #tpu.memory_space<vmem>>, %arg4: memref<128x128xbf16, #tpu.memory_space<vmem>>, %arg5: memref<32x128xbf16, #tpu.memory_space<vmem>>, %arg6: memref<128x128xbf16, #tpu.memory_space<vmem>>, %arg7: memref<32x128xbf16, #tpu.memory_space<vmem>>, %arg8: memref<6x128xf32, #tpu.memory_space<vmem>>, %arg9: memref<1x32xf32, #tpu.memory_space<vmem>>, %arg10: memref<4x32xf32, #tpu.memory_space<vmem>>, %arg11: memref<4x32xf32, #tpu.memory_space<vmem>>, %arg12: memref<2x32xf32, #tpu.memory_space<vmem>>, %arg13: memref<3x32xf32, #tpu.memory_space<vmem>>) attributes {dimension_semantics = [#tpu.dimension_semantics<arbitrary>], iteration_bounds = array<i64: 1>, scalar_prefetch = 0 : i64, scratch_operands = 2 : i64, tpu.core_type = #tpu.core_type<tc>, window_params = [{transform_indices = @transform_0, window_bounds = array<i64: 4>}, {transform_indices = @transform_1, window_bounds = array<i64: 32, 128>}, {pipeline_mode = #tpu.pipeline_mode<synchronous>, transform_indices = @transform_2, window_bounds = array<i64: 32, 128>}, {pipeline_mode = #tpu.pipeline_mode<synchronous>, transform_indices = @transform_3, window_bounds = array<i64: 128, 128>}, {pipeline_mode = #tpu.pipeline_mode<synchronous>, transform_indices = @transform_4, window_bounds = array<i64: 32, 128>}, {pipeline_mode = #tpu.pipeline_mode<synchronous>, transform_indices = @transform_5, window_bounds = array<i64: 128, 128>}, {pipeline_mode = #tpu.pipeline_mode<synchronous>, transform_indices = @transform_6, window_bounds = array<i64: 32, 128>}, {pipeline_mode = #tpu.pipeline_mode<synchronous>, transform_indices = @transform_7, window_bounds = array<i64: 6, 128>}, {pipeline_mode = #tpu.pipeline_mode<synchronous>, transform_indices = @transform_8, window_bounds = array<i64: 1, 32>}, {transform_indices = @transform_9, window_bounds = array<i64: 4, 32>}, {pipeline_mode = #tpu.pipeline_mode<synchronous>, transform_indices = @transform_10, window_bounds = array<i64: 4, 32>}]} {
    %c0 = arith.constant 0 : index
    %0 = memref.load %arg1[%c0] : memref<4xf32, #tpu.memory_space<smem>>
    %c1 = arith.constant 1 : index
    %1 = memref.load %arg1[%c1] : memref<4xf32, #tpu.memory_space<smem>>
    %c2 = arith.constant 2 : index
    %2 = memref.load %arg1[%c2] : memref<4xf32, #tpu.memory_space<smem>>
    %c3 = arith.constant 3 : index
    %3 = memref.load %arg1[%c3] : memref<4xf32, #tpu.memory_space<smem>>
    %c0_0 = arith.constant 0 : index
    %c0_1 = arith.constant 0 : index
    %4 = vector.load %arg8[%c0_0, %c0_1] : memref<6x128xf32, #tpu.memory_space<vmem>>, vector<1x128xf32>
    %c1_2 = arith.constant 1 : index
    %c0_3 = arith.constant 0 : index
    %5 = vector.load %arg8[%c1_2, %c0_3] : memref<6x128xf32, #tpu.memory_space<vmem>>, vector<1x32xf32>
    %c2_4 = arith.constant 2 : index
    %c0_5 = arith.constant 0 : index
    %6 = vector.load %arg8[%c2_4, %c0_5] : memref<6x128xf32, #tpu.memory_space<vmem>>, vector<1x32xf32>
    %c3_6 = arith.constant 3 : index
    %c0_7 = arith.constant 0 : index
    %7 = vector.load %arg8[%c3_6, %c0_7] : memref<6x128xf32, #tpu.memory_space<vmem>>, vector<1x128xf32>
    %c4 = arith.constant 4 : index
    %c0_8 = arith.constant 0 : index
    %8 = vector.load %arg8[%c4, %c0_8] : memref<6x128xf32, #tpu.memory_space<vmem>>, vector<1x32xf32>
    %c5 = arith.constant 5 : index
    %c0_9 = arith.constant 0 : index
    %9 = vector.load %arg8[%c5, %c0_9] : memref<6x128xf32, #tpu.memory_space<vmem>>, vector<1x32xf32>
    %c0_10 = arith.constant 0 : index
    %c0_11 = arith.constant 0 : index
    %10 = vector.load %arg3[%c0_10, %c0_11] : memref<32x128xbf16, #tpu.memory_space<vmem>>, vector<32x128xbf16>
    %c0_12 = arith.constant 0 : index
    %c0_13 = arith.constant 0 : index
    %11 = vector.load %arg2[%c0_12, %c0_13] : memref<32x128xbf16, #tpu.memory_space<vmem>>, vector<32x128xbf16>
    %c0_i32 = arith.constant 0 : i32
    %12 = arith.cmpi eq, %arg0, %c0_i32 : i32
    %13 = arith.extui %12 : i1 to i32
    %c0_i32_14 = arith.constant 0 : i32
    %14 = arith.cmpi ne, %13, %c0_i32_14 : i32
    scf.if %14 {
      %c0_67 = arith.constant 0 : index
      %c0_68 = arith.constant 0 : index
      %136 = vector.load %arg6[%c0_67, %c0_68] : memref<128x128xbf16, #tpu.memory_space<vmem>>, vector<128x128xbf16>
      %c0_69 = arith.constant 0 : index
      %c0_70 = arith.constant 0 : index
      %137 = vector.load %arg7[%c0_69, %c0_70] : memref<32x128xbf16, #tpu.memory_space<vmem>>, vector<32x128xbf16>
      %cst_71 = arith.constant dense<0.000000e+00> : vector<32x128xf32>
      %138 = tpu.matmul %10, %136, %cst_71 {dimension_numbers = #tpu.dot_dimension_numbers<[1], [1], [0], [0], [0, 0, 1, 0], [], []>} : vector<32x128xbf16>, vector<128x128xbf16>, vector<32x128xf32> -> vector<32x128xf32>
      %139 = vector.broadcast %7 : vector<1x128xf32> to vector<32x128xf32>
      %140 = arith.addf %138, %139 : vector<32x128xf32>
      %cst_72 = arith.constant 5.000000e-01 : f32
      %141 = vector.broadcast %cst_72 : f32 to vector<32x128xf32>
      %142 = arith.mulf %141, %140 : vector<32x128xf32>
      %143 = math.tanh %142 : vector<32x128xf32>
      %cst_73 = arith.constant 1.000000e+00 : f32
      %144 = vector.broadcast %cst_73 : f32 to vector<32x128xf32>
      %145 = arith.addf %143, %144 : vector<32x128xf32>
      %cst_74 = arith.constant 5.000000e-01 : f32
      %146 = vector.broadcast %cst_74 : f32 to vector<32x128xf32>
      %147 = arith.mulf %146, %145 : vector<32x128xf32>
      %148 = arith.truncf %147 : vector<32x128xf32> to vector<32x128xbf16>
      %cst_75 = arith.constant dense<0.000000e+00> : vector<32x32xf32>
      %149 = tpu.matmul %148, %137, %cst_75 {dimension_numbers = #tpu.dot_dimension_numbers<[1], [1], [0], [0], [0, 0, 1, 0], [], []>} : vector<32x128xbf16>, vector<32x128xbf16>, vector<32x32xf32> -> vector<32x32xf32>
      %150 = vector.broadcast %2 : f32 to vector<32x32xf32>
      %151 = arith.mulf %149, %150 : vector<32x32xf32>
      %cst_76 = arith.constant dense<0xFF800000> : vector<32xf32>
      %152 = vector.multi_reduction <maximumf>, %151, %cst_76 [1] : vector<32x32xf32> to vector<32xf32>
      %153 = vector.shape_cast %152 : vector<32xf32> to vector<32x1xf32>
      %154 = vector.broadcast %153 : vector<32x1xf32> to vector<32x32xf32>
      %155 = arith.subf %151, %154 : vector<32x32xf32>
      %156 = math.exp %155 : vector<32x32xf32>
      %cst_77 = arith.constant dense<0.000000e+00> : vector<32xf32>
      %157 = vector.multi_reduction <add>, %156, %cst_77 [1] : vector<32x32xf32> to vector<32xf32>
      %158 = vector.shape_cast %157 : vector<32xf32> to vector<32x1xf32>
      %159 = tpu.reciprocal %158 {approx = true} : vector<32x1xf32> -> vector<32x1xf32>
      %160 = vector.broadcast %159 : vector<32x1xf32> to vector<32x32xf32>
      %161 = arith.mulf %156, %160 : vector<32x32xf32>
      %cst_78 = arith.constant 5.000000e-01 : f32
      %162 = vector.broadcast %cst_78 : f32 to vector<32x32xf32>
      %163 = arith.mulf %162, %149 : vector<32x32xf32>
      %164 = math.tanh %163 : vector<32x32xf32>
      %cst_79 = arith.constant 1.000000e+00 : f32
      %165 = vector.broadcast %cst_79 : f32 to vector<32x32xf32>
      %166 = arith.addf %164, %165 : vector<32x32xf32>
      %cst_80 = arith.constant 5.000000e-01 : f32
      %167 = vector.broadcast %cst_80 : f32 to vector<32x32xf32>
      %168 = arith.mulf %167, %166 : vector<32x32xf32>
      %169 = arith.mulf %161, %168 : vector<32x32xf32>
      %170 = vector.broadcast %8 : vector<1x32xf32> to vector<32x32xf32>
      %171 = arith.mulf %169, %170 : vector<32x32xf32>
      %cst_81 = arith.constant dense<0.000000e+00> : vector<32xf32>
      %172 = vector.multi_reduction <add>, %171, %cst_81 [1] : vector<32x32xf32> to vector<32xf32>
      %173 = vector.broadcast %3 : f32 to vector<32xf32>
      %174 = arith.addf %172, %173 : vector<32xf32>
      %175 = vector.broadcast %9 : vector<1x32xf32> to vector<32x32xf32>
      %176 = arith.mulf %168, %175 : vector<32x32xf32>
      %cst_82 = arith.constant dense<0.000000e+00> : vector<32xf32>
      %177 = vector.multi_reduction <add>, %176, %cst_82 [1] : vector<32x32xf32> to vector<32xf32>
      %cst_83 = arith.constant 3.125000e-02 : f32
      %178 = vector.broadcast %cst_83 : f32 to vector<32xf32>
      %179 = arith.mulf %177, %178 : vector<32xf32>
      %180 = arith.subf %174, %179 : vector<32xf32>
      %cst_84 = arith.constant 1.250000e-01 : f32
      %181 = vector.broadcast %cst_84 : f32 to vector<32xf32>
      %182 = arith.mulf %180, %181 : vector<32xf32>
      %cst_85 = arith.constant 1.000000e-03 : f32
      %183 = vector.broadcast %cst_85 : f32 to vector<32xf32>
      %184 = arith.maximumf %182, %183 : vector<32xf32>
      %c0_86 = arith.constant 0 : index
      %c0_87 = arith.constant 0 : index
      %185 = vector.load %arg12[%c0_86, %c0_87] : memref<2x32xf32, #tpu.memory_space<vmem>>, vector<1x32xf32>
      %186 = vector.shape_cast %185 : vector<1x32xf32> to vector<32xf32>
      %187 = vector.shape_cast %184 : vector<32xf32> to vector<1x32xf32>
      tpu.vector_store %arg12[%c0_86, %c0_87], %187 {strides = array<i32>} : memref<2x32xf32, #tpu.memory_space<vmem>>, vector<1x32xf32>,
      %cst_88 = arith.constant 1.000000e+00 : f32
      %188 = vector.broadcast %cst_88 : f32 to vector<32xf32>
      %189 = arith.divf %188, %184 : vector<32xf32>
      %c1_89 = arith.constant 1 : index
      %c0_90 = arith.constant 0 : index
      %190 = vector.load %arg12[%c1_89, %c0_90] : memref<2x32xf32, #tpu.memory_space<vmem>>, vector<1x32xf32>
      %191 = vector.shape_cast %190 : vector<1x32xf32> to vector<32xf32>
      %192 = vector.shape_cast %189 : vector<32xf32> to vector<1x32xf32>
      tpu.vector_store %arg12[%c1_89, %c0_90], %192 {strides = array<i32>} : memref<2x32xf32, #tpu.memory_space<vmem>>, vector<1x32xf32>,
      %cst_91 = arith.constant -1.000000e+30 : f32
      %193 = vector.broadcast %cst_91 : f32 to vector<32xf32>
      %c0_92 = arith.constant 0 : index
      %c0_93 = arith.constant 0 : index
      %194 = vector.load %arg13[%c0_92, %c0_93] : memref<3x32xf32, #tpu.memory_space<vmem>>, vector<1x32xf32>
      %195 = vector.shape_cast %194 : vector<1x32xf32> to vector<32xf32>
      %196 = vector.shape_cast %193 : vector<32xf32> to vector<1x32xf32>
      tpu.vector_store %arg13[%c0_92, %c0_93], %196 {strides = array<i32>} : memref<3x32xf32, #tpu.memory_space<vmem>>, vector<1x32xf32>,
      %cst_94 = arith.constant 0.000000e+00 : f32
      %197 = vector.broadcast %cst_94 : f32 to vector<32xf32>
      %c1_95 = arith.constant 1 : index
      %c0_96 = arith.constant 0 : index
      %198 = vector.load %arg13[%c1_95, %c0_96] : memref<3x32xf32, #tpu.memory_space<vmem>>, vector<1x32xf32>
      %199 = vector.shape_cast %198 : vector<1x32xf32> to vector<32xf32>
      %200 = vector.shape_cast %197 : vector<32xf32> to vector<1x32xf32>
      tpu.vector_store %arg13[%c1_95, %c0_96], %200 {strides = array<i32>} : memref<3x32xf32, #tpu.memory_space<vmem>>, vector<1x32xf32>,
      %cst_97 = arith.constant 0.000000e+00 : f32
      %201 = vector.broadcast %cst_97 : f32 to vector<32xf32>
      %c2_98 = arith.constant 2 : index
      %c0_99 = arith.constant 0 : index
      %202 = vector.load %arg13[%c2_98, %c0_99] : memref<3x32xf32, #tpu.memory_space<vmem>>, vector<1x32xf32>
      %203 = vector.shape_cast %202 : vector<1x32xf32> to vector<32xf32>
      %204 = vector.shape_cast %201 : vector<32xf32> to vector<1x32xf32>
      tpu.vector_store %arg13[%c2_98, %c0_99], %204 {strides = array<i32>} : memref<3x32xf32, #tpu.memory_space<vmem>>, vector<1x32xf32>,
    } else {
    }
    %cst = arith.constant dense<0.000000e+00> : vector<32x32xf32>
    %15 = tpu.matmul %11, %10, %cst {dimension_numbers = #tpu.dot_dimension_numbers<[1], [1], [0], [0], [0, 0, 1, 0], [], []>} : vector<32x128xbf16>, vector<32x128xbf16>, vector<32x32xf32> -> vector<32x32xf32>
    %c32_i32 = arith.constant 32 : i32
    %16 = arith.muli %arg0, %c32_i32 : i32
    %17 = tpu.iota {dimensions = array<i32: 0>} : vector<32x32xi32>
    %18 = vector.broadcast %16 : i32 to vector<32x32xi32>
    %19 = arith.addi %18, %17 : vector<32x32xi32>
    %20 = tpu.iota {dimensions = array<i32: 1>} : vector<32x32xi32>
    %21 = arith.cmpi eq, %20, %19 : vector<32x32xi32>
    %cst_15 = arith.constant 0.000000e+00 : f32
    %22 = vector.broadcast %cst_15 : f32 to vector<32x32xf32>
    %23 = arith.select %21, %15, %22 : vector<32x32xi1>, vector<32x32xf32>
    %cst_16 = arith.constant dense<0.000000e+00> : vector<32xf32>
    %24 = vector.multi_reduction <add>, %23, %cst_16 [1] : vector<32x32xf32> to vector<32xf32>
    %c0_17 = arith.constant 0 : index
    %c0_18 = arith.constant 0 : index
    %25 = vector.load %arg4[%c0_17, %c0_18] : memref<128x128xbf16, #tpu.memory_space<vmem>>, vector<128x128xbf16>
    %c0_19 = arith.constant 0 : index
    %c0_20 = arith.constant 0 : index
    %26 = vector.load %arg5[%c0_19, %c0_20] : memref<32x128xbf16, #tpu.memory_space<vmem>>, vector<32x128xbf16>
    %cst_21 = arith.constant dense<0.000000e+00> : vector<32x128xf32>
    %27 = tpu.matmul %11, %25, %cst_21 {dimension_numbers = #tpu.dot_dimension_numbers<[1], [1], [0], [0], [0, 0, 1, 0], [], []>} : vector<32x128xbf16>, vector<128x128xbf16>, vector<32x128xf32> -> vector<32x128xf32>
    %28 = vector.broadcast %4 : vector<1x128xf32> to vector<32x128xf32>
    %29 = arith.addf %27, %28 : vector<32x128xf32>
    %cst_22 = arith.constant 5.000000e-01 : f32
    %30 = vector.broadcast %cst_22 : f32 to vector<32x128xf32>
    %31 = arith.mulf %30, %29 : vector<32x128xf32>
    %32 = math.tanh %31 : vector<32x128xf32>
    %cst_23 = arith.constant 1.000000e+00 : f32
    %33 = vector.broadcast %cst_23 : f32 to vector<32x128xf32>
    %34 = arith.addf %32, %33 : vector<32x128xf32>
    %cst_24 = arith.constant 5.000000e-01 : f32
    %35 = vector.broadcast %cst_24 : f32 to vector<32x128xf32>
    %36 = arith.mulf %35, %34 : vector<32x128xf32>
    %37 = arith.truncf %36 : vector<32x128xf32> to vector<32x128xbf16>
    %cst_25 = arith.constant dense<0.000000e+00> : vector<32x32xf32>
    %38 = tpu.matmul %37, %26, %cst_25 {dimension_numbers = #tpu.dot_dimension_numbers<[1], [1], [0], [0], [0, 0, 1, 0], [], []>} : vector<32x128xbf16>, vector<32x128xbf16>, vector<32x32xf32> -> vector<32x32xf32>
    %39 = vector.broadcast %0 : f32 to vector<32x32xf32>
    %40 = arith.mulf %38, %39 : vector<32x32xf32>
    %cst_26 = arith.constant dense<0xFF800000> : vector<32xf32>
    %41 = vector.multi_reduction <maximumf>, %40, %cst_26 [1] : vector<32x32xf32> to vector<32xf32>
    %42 = vector.shape_cast %41 : vector<32xf32> to vector<32x1xf32>
    %43 = vector.broadcast %42 : vector<32x1xf32> to vector<32x32xf32>
    %44 = arith.subf %40, %43 : vector<32x32xf32>
    %45 = math.exp %44 : vector<32x32xf32>
    %cst_27 = arith.constant dense<0.000000e+00> : vector<32xf32>
    %46 = vector.multi_reduction <add>, %45, %cst_27 [1] : vector<32x32xf32> to vector<32xf32>
    %47 = vector.shape_cast %46 : vector<32xf32> to vector<32x1xf32>
    %48 = tpu.reciprocal %47 {approx = true} : vector<32x1xf32> -> vector<32x1xf32>
    %49 = vector.broadcast %48 : vector<32x1xf32> to vector<32x32xf32>
    %50 = arith.mulf %45, %49 : vector<32x32xf32>
    %cst_28 = arith.constant 5.000000e-01 : f32
    %51 = vector.broadcast %cst_28 : f32 to vector<32x32xf32>
    %52 = arith.mulf %51, %38 : vector<32x32xf32>
    %53 = math.tanh %52 : vector<32x32xf32>
    %cst_29 = arith.constant 1.000000e+00 : f32
    %54 = vector.broadcast %cst_29 : f32 to vector<32x32xf32>
    %55 = arith.addf %53, %54 : vector<32x32xf32>
    %cst_30 = arith.constant 5.000000e-01 : f32
    %56 = vector.broadcast %cst_30 : f32 to vector<32x32xf32>
    %57 = arith.mulf %56, %55 : vector<32x32xf32>
    %58 = arith.mulf %50, %57 : vector<32x32xf32>
    %59 = vector.broadcast %5 : vector<1x32xf32> to vector<32x32xf32>
    %60 = arith.mulf %58, %59 : vector<32x32xf32>
    %cst_31 = arith.constant dense<0.000000e+00> : vector<32xf32>
    %61 = vector.multi_reduction <add>, %60, %cst_31 [1] : vector<32x32xf32> to vector<32xf32>
    %62 = vector.broadcast %1 : f32 to vector<32xf32>
    %63 = arith.addf %61, %62 : vector<32xf32>
    %64 = vector.broadcast %6 : vector<1x32xf32> to vector<32x32xf32>
    %65 = arith.mulf %57, %64 : vector<32x32xf32>
    %cst_32 = arith.constant dense<0.000000e+00> : vector<32xf32>
    %66 = vector.multi_reduction <add>, %65, %cst_32 [1] : vector<32x32xf32> to vector<32xf32>
    %cst_33 = arith.constant 3.125000e-02 : f32
    %67 = vector.broadcast %cst_33 : f32 to vector<32xf32>
    %68 = arith.mulf %66, %67 : vector<32xf32>
    %69 = arith.subf %63, %68 : vector<32xf32>
    %cst_34 = arith.constant 1.250000e-01 : f32
    %70 = vector.broadcast %cst_34 : f32 to vector<32xf32>
    %71 = arith.mulf %69, %70 : vector<32xf32>
    %cst_35 = arith.constant 1.000000e-03 : f32
    %72 = vector.broadcast %cst_35 : f32 to vector<32xf32>
    %73 = arith.maximumf %71, %72 : vector<32xf32>
    %cst_36 = arith.constant 1.000000e+00 : f32
    %74 = vector.broadcast %cst_36 : f32 to vector<32xf32>
    %75 = arith.divf %74, %73 : vector<32xf32>
    %76 = vector.shape_cast %24 : vector<32xf32> to vector<32x1xf32>
    %77 = vector.broadcast %76 : vector<32x1xf32> to vector<32x32xf32>
    %78 = arith.subf %15, %77 : vector<32x32xf32>
    %79 = vector.shape_cast %75 : vector<32xf32> to vector<32x1xf32>
    %80 = vector.broadcast %79 : vector<32x1xf32> to vector<32x32xf32>
    %81 = arith.mulf %78, %80 : vector<32x32xf32>
    %cst_37 = arith.constant 0.000000e+00 : f32
    %82 = vector.broadcast %cst_37 : f32 to vector<32x32xf32>
    %83 = arith.select %21, %82, %81 : vector<32x32xi1>, vector<32x32xf32>
    %cst_38 = arith.constant dense<0xFF800000> : vector<32xf32>
    %84 = vector.multi_reduction <maximumf>, %83, %cst_38 [1] : vector<32x32xf32> to vector<32xf32>
    %85 = vector.shape_cast %84 : vector<32xf32> to vector<32x1xf32>
    %86 = vector.broadcast %85 : vector<32x1xf32> to vector<32x32xf32>
    %87 = arith.subf %83, %86 : vector<32x32xf32>
    %88 = math.exp %87 : vector<32x32xf32>
    %cst_39 = arith.constant 0.000000e+00 : f32
    %89 = vector.broadcast %cst_39 : f32 to vector<32x32xf32>
    %90 = arith.select %21, %89, %88 : vector<32x32xi1>, vector<32x32xf32>
    %cst_40 = arith.constant dense<0.000000e+00> : vector<32xf32>
    %91 = vector.multi_reduction <add>, %90, %cst_40 [1] : vector<32x32xf32> to vector<32xf32>
    %92 = arith.mulf %90, %83 : vector<32x32xf32>
    %cst_41 = arith.constant dense<0.000000e+00> : vector<32xf32>
    %93 = vector.multi_reduction <add>, %92, %cst_41 [1] : vector<32x32xf32> to vector<32xf32>
    %94 = vector.shape_cast %73 : vector<32xf32> to vector<1x32xf32>
    %95 = vector.shape_cast %84 : vector<32xf32> to vector<1x32xf32>
    %96 = vector.shape_cast %91 : vector<32xf32> to vector<1x32xf32>
    %97 = vector.shape_cast %93 : vector<32xf32> to vector<1x32xf32>
    %98 = tpu.concatenate %94, %95, %96, %97 in 0 : vector<1x32xf32>, vector<1x32xf32>, vector<1x32xf32>, vector<1x32xf32> -> vector<4x32xf32>
    %c0_42 = arith.constant 0 : index
    %c0_43 = arith.constant 0 : index
    %99 = vector.load %arg10[%c0_42, %c0_43] : memref<4x32xf32, #tpu.memory_space<vmem>>, vector<4x32xf32>
    tpu.vector_store %arg10[%c0_42, %c0_43], %98 {strides = array<i32>} : memref<4x32xf32, #tpu.memory_space<vmem>>, vector<4x32xf32>,
    %c1_44 = arith.constant 1 : index
    %c0_45 = arith.constant 0 : index
    %100 = vector.load %arg12[%c1_44, %c0_45] : memref<2x32xf32, #tpu.memory_space<vmem>>, vector<1x32xf32>
    %c0_46 = arith.constant 0 : index
    %c0_47 = arith.constant 0 : index
    %101 = vector.load %arg9[%c0_46, %c0_47] : memref<1x32xf32, #tpu.memory_space<vmem>>, vector<1x32xf32>
    %102 = vector.broadcast %101 : vector<1x32xf32> to vector<32x32xf32>
    %103 = arith.subf %15, %102 : vector<32x32xf32>
    %104 = vector.broadcast %100 : vector<1x32xf32> to vector<32x32xf32>
    %105 = arith.mulf %103, %104 : vector<32x32xf32>
    %cst_48 = arith.constant 0.000000e+00 : f32
    %106 = vector.broadcast %cst_48 : f32 to vector<32x32xf32>
    %107 = arith.select %21, %106, %105 : vector<32x32xi1>, vector<32x32xf32>
    %c0_49 = arith.constant 0 : index
    %c0_50 = arith.constant 0 : index
    %108 = vector.load %arg13[%c0_49, %c0_50] : memref<3x32xf32, #tpu.memory_space<vmem>>, vector<1x32xf32>
    %cst_51 = arith.constant dense<0xFF800000> : vector<32xf32>
    %109 = vector.multi_reduction <maximumf>, %107, %cst_51 [0] : vector<32x32xf32> to vector<32xf32>
    %110 = vector.shape_cast %109 : vector<32xf32> to vector<1x32xf32>
    %111 = arith.maximumf %108, %110 : vector<1x32xf32>
    %112 = arith.subf %108, %111 : vector<1x32xf32>
    %113 = math.exp %112 : vector<1x32xf32>
    %114 = vector.broadcast %111 : vector<1x32xf32> to vector<32x32xf32>
    %115 = arith.subf %107, %114 : vector<32x32xf32>
    %116 = math.exp %115 : vector<32x32xf32>
    %cst_52 = arith.constant 0.000000e+00 : f32
    %117 = vector.broadcast %cst_52 : f32 to vector<32x32xf32>
    %118 = arith.select %21, %117, %116 : vector<32x32xi1>, vector<32x32xf32>
    %c0_53 = arith.constant 0 : index
    %c0_54 = arith.constant 0 : index
    %119 = vector.load %arg13[%c0_53, %c0_54] : memref<3x32xf32, #tpu.memory_space<vmem>>, vector<1x32xf32>
    tpu.vector_store %arg13[%c0_53, %c0_54], %111 {strides = array<i32>} : memref<3x32xf32, #tpu.memory_space<vmem>>, vector<1x32xf32>,
    %c1_55 = arith.constant 1 : index
    %c0_56 = arith.constant 0 : index
    %120 = vector.load %arg13[%c1_55, %c0_56] : memref<3x32xf32, #tpu.memory_space<vmem>>, vector<1x32xf32>
    %121 = arith.mulf %120, %113 : vector<1x32xf32>
    %cst_57 = arith.constant dense<0.000000e+00> : vector<32xf32>
    %122 = vector.multi_reduction <add>, %118, %cst_57 [0] : vector<32x32xf32> to vector<32xf32>
    %123 = vector.shape_cast %122 : vector<32xf32> to vector<1x32xf32>
    %124 = arith.addf %121, %123 : vector<1x32xf32>
    %c1_58 = arith.constant 1 : index
    %c0_59 = arith.constant 0 : index
    %125 = vector.load %arg13[%c1_58, %c0_59] : memref<3x32xf32, #tpu.memory_space<vmem>>, vector<1x32xf32>
    tpu.vector_store %arg13[%c1_58, %c0_59], %124 {strides = array<i32>} : memref<3x32xf32, #tpu.memory_space<vmem>>, vector<1x32xf32>,
    %c2_60 = arith.constant 2 : index
    %c0_61 = arith.constant 0 : index
    %126 = vector.load %arg13[%c2_60, %c0_61] : memref<3x32xf32, #tpu.memory_space<vmem>>, vector<1x32xf32>
    %127 = arith.mulf %126, %113 : vector<1x32xf32>
    %128 = arith.mulf %118, %107 : vector<32x32xf32>
    %cst_62 = arith.constant dense<0.000000e+00> : vector<32xf32>
    %129 = vector.multi_reduction <add>, %128, %cst_62 [0] : vector<32x32xf32> to vector<32xf32>
    %130 = vector.shape_cast %129 : vector<32xf32> to vector<1x32xf32>
    %131 = arith.addf %127, %130 : vector<1x32xf32>
    %c2_63 = arith.constant 2 : index
    %c0_64 = arith.constant 0 : index
    %132 = vector.load %arg13[%c2_63, %c0_64] : memref<3x32xf32, #tpu.memory_space<vmem>>, vector<1x32xf32>
    tpu.vector_store %arg13[%c2_63, %c0_64], %131 {strides = array<i32>} : memref<3x32xf32, #tpu.memory_space<vmem>>, vector<1x32xf32>,
    %c0_i32_65 = arith.constant 0 : i32
    %133 = arith.cmpi eq, %arg0, %c0_i32_65 : i32
    %134 = arith.extui %133 : i1 to i32
    %c0_i32_66 = arith.constant 0 : i32
    %135 = arith.cmpi ne, %134, %c0_i32_66 : i32
    scf.if %135 {
      %c0_67 = arith.constant 0 : index
      %c0_68 = arith.constant 0 : index
      %136 = vector.load %arg12[%c0_67, %c0_68] : memref<2x32xf32, #tpu.memory_space<vmem>>, vector<1x32xf32>
      %c0_69 = arith.constant 0 : index
      %c0_70 = arith.constant 0 : index
      %137 = vector.load %arg13[%c0_69, %c0_70] : memref<3x32xf32, #tpu.memory_space<vmem>>, vector<1x32xf32>
      %c1_71 = arith.constant 1 : index
      %c0_72 = arith.constant 0 : index
      %138 = vector.load %arg13[%c1_71, %c0_72] : memref<3x32xf32, #tpu.memory_space<vmem>>, vector<1x32xf32>
      %c2_73 = arith.constant 2 : index
      %c0_74 = arith.constant 0 : index
      %139 = vector.load %arg13[%c2_73, %c0_74] : memref<3x32xf32, #tpu.memory_space<vmem>>, vector<1x32xf32>
      %140 = tpu.concatenate %136, %137, %138, %139 in 0 : vector<1x32xf32>, vector<1x32xf32>, vector<1x32xf32>, vector<1x32xf32> -> vector<4x32xf32>
      %c0_75 = arith.constant 0 : index
      %c0_76 = arith.constant 0 : index
      %141 = vector.load %arg11[%c0_75, %c0_76] : memref<4x32xf32, #tpu.memory_space<vmem>>, vector<4x32xf32>
      tpu.vector_store %arg11[%c0_75, %c0_76], %140 {strides = array<i32>} : memref<4x32xf32, #tpu.memory_space<vmem>>, vector<4x32xf32>,
    } else {
    }
    return
  }
  func.func @transform_0(%arg0: i32) -> i32 {
    %c0_i32 = arith.constant 0 : i32
    %c0_i32_0 = arith.constant 0 : i32
    return %c0_i32 : i32
  }
  func.func @transform_1(%arg0: i32) -> (i32, i32) {
    %c0_i32 = arith.constant 0 : i32
    %c0_i32_0 = arith.constant 0 : i32
    return %arg0, %c0_i32 : i32, i32
  }
  func.func @transform_2(%arg0: i32) -> (i32, i32) {
    %c0_i32 = arith.constant 0 : i32
    %c0_i32_0 = arith.constant 0 : i32
    %c0_i32_1 = arith.constant 0 : i32
    return %c0_i32, %c0_i32_0 : i32, i32
  }
  func.func @transform_3(%arg0: i32) -> (i32, i32) {
    %c0_i32 = arith.constant 0 : i32
    %c0_i32_0 = arith.constant 0 : i32
    %c0_i32_1 = arith.constant 0 : i32
    return %c0_i32, %c0_i32_0 : i32, i32
  }
  func.func @transform_4(%arg0: i32) -> (i32, i32) {
    %c0_i32 = arith.constant 0 : i32
    %c0_i32_0 = arith.constant 0 : i32
    %c0_i32_1 = arith.constant 0 : i32
    return %c0_i32, %c0_i32_0 : i32, i32
  }
  func.func @transform_5(%arg0: i32) -> (i32, i32) {
    %c0_i32 = arith.constant 0 : i32
    %c0_i32_0 = arith.constant 0 : i32
    %c0_i32_1 = arith.constant 0 : i32
    return %c0_i32, %c0_i32_0 : i32, i32
  }
  func.func @transform_6(%arg0: i32) -> (i32, i32) {
    %c0_i32 = arith.constant 0 : i32
    %c0_i32_0 = arith.constant 0 : i32
    %c0_i32_1 = arith.constant 0 : i32
    return %c0_i32, %c0_i32_0 : i32, i32
  }
  func.func @transform_7(%arg0: i32) -> (i32, i32) {
    %c0_i32 = arith.constant 0 : i32
    %c0_i32_0 = arith.constant 0 : i32
    %c0_i32_1 = arith.constant 0 : i32
    return %c0_i32, %c0_i32_0 : i32, i32
  }
  func.func @transform_8(%arg0: i32) -> (i32, i32) {
    %c0_i32 = arith.constant 0 : i32
    %c0_i32_0 = arith.constant 0 : i32
    %c0_i32_1 = arith.constant 0 : i32
    return %c0_i32, %c0_i32_0 : i32, i32
  }
  func.func @transform_9(%arg0: i32) -> (i32, i32) {
    %c0_i32 = arith.constant 0 : i32
    %c0_i32_0 = arith.constant 0 : i32
    return %c0_i32, %arg0 : i32, i32
  }
  func.func @transform_10(%arg0: i32) -> (i32, i32) {
    %c0_i32 = arith.constant 0 : i32
    %c0_i32_0 = arith.constant 0 : i32
    %c0_i32_1 = arith.constant 0 : i32
    return %c0_i32, %c0_i32_0 : i32, i32
  }
}

</mosaic_0001>

<llo_original>
// kernel: isogclr_tempnet_loss.1
$region0: #{isogclr_tempnet_loss.1}
  #allocation0 [shape = 'u32[]', space=smem, size = 0x4, offset = 0x4, fixed_abs, tag = 'smem constant byte address 0x4 - core index']
  #allocation1 [shape = 'u32[144,128]{1,0:T(1,128)}', space=vmem, size = 0x12000, scoped, tag = 'internal scratch']
  #allocation2 [shape = 'f32[2,32]{1,0:T(2,128)}', space=vmem, size = 0x400, scoped, tag = 'scratch operand']
  #allocation3 [shape = 'f32[3,32]{1,0:T(4,128)}', space=vmem, size = 0x800, scoped, tag = 'scratch operand']
  %s0 = inlined_call_operand.vmem [shape: f32[4], index: 0, kind: input, shape index: {}]
  %s1 = inlined_call_operand.vmem [shape: bf16[32,128], index: 1, kind: input, shape index: {}]
  %s2 = inlined_call_operand.vmem [shape: bf16[32,128], index: 2, kind: input, shape index: {}]
  %s3 = inlined_call_operand.vmem [shape: bf16[128,128], index: 3, kind: input, shape index: {}]
  %s4 = inlined_call_operand.vmem [shape: bf16[32,128], index: 4, kind: input, shape index: {}]
  %s5 = inlined_call_operand.vmem [shape: bf16[128,128], index: 5, kind: input, shape index: {}]
  %s6 = inlined_call_operand.vmem [shape: bf16[32,128], index: 6, kind: input, shape index: {}]
  %s7 = inlined_call_operand.vmem [shape: f32[6,128], index: 7, kind: input, shape index: {}]
  %s8 = inlined_call_operand.vmem [shape: f32[1,32], index: 8, kind: input, shape index: {}]
  %s9 = inlined_call_operand.vmem [shape: f32[4,32], index: 9, kind: output, shape index: {0}]
  %s10 = inlined_call_operand.vmem [shape: f32[4,32], index: 10, kind: output, shape index: {1}]
  %11 = xla_tuple %s9, %s10
  %s12 = sld [smem:[#allocation0]]
  $region66: #{isogclr_tempnet_loss.1} parent=0
    _
  %s14 = ssub.s32 1, %s12
  %s15 = scalar_select 0, %s14, %s12
  $region1: #{isogclr_tempnet_loss.1} parent=0
    #allocation4 [shape = 'u8[512]{0}', space=smem, size = 0x200, scoped, tag = 'input window, operand 0, single buffered']
    #allocation5 [shape = 's32[1]{0}', space=sflag, size = 0x4, scoped, tag = 'scoped memory for isogclr_tempnet_loss.1']
    %16 = vsyncpa [#allocation5], 0
    // Predicated region
    $region2: #{isogclr_tempnet_loss.1} parent=1 // pred_check
      _
    $region3: #{isogclr_tempnet_loss.1} parent=1 // pred_check_branch
      %18 = sbr.rel (0) target = $region5
    $region4: #{isogclr_tempnet_loss.1} parent=1 // pred_region
      %s20 = ssub.s32 16, 16
      %21 = vsyncadd [#allocation5], %s20
      %s23 = sshll.u32 %s0, 4
      %s24 = int_to_ptr.vmem [resolvable:$true] %s23
      %26 = dma.vmem_to_smem %s24, 16, [#allocation4], [#allocation5]
    $region5: #{isogclr_tempnet_loss.1} parent=1 // pred_fallthru
      _
    // Predicated region
    $region6: #{isogclr_tempnet_loss.1} parent=1 // pred_check
      _
    $region7: #{isogclr_tempnet_loss.1} parent=1 // pred_check_branch
      %28 = sbr.rel (0) target = $region9
    $region8: #{isogclr_tempnet_loss.1} parent=1 // pred_region
      _
    $region9: #{isogclr_tempnet_loss.1} parent=1 // pred_fallthru
      _
    // Predicated region
    $region10: #{isogclr_tempnet_loss.1} parent=1 // pred_check
      _
    $region11: #{isogclr_tempnet_loss.1} parent=1 // pred_check_branch
      %30 = sbr.rel (0) target = $region13
    $region12: #{isogclr_tempnet_loss.1} parent=1 // pred_region
      _
    $region13: #{isogclr_tempnet_loss.1} parent=1 // pred_fallthru
      _
    // Predicated region
    $region14: #{isogclr_tempnet_loss.1} parent=1 // pred_check
      _
    $region15: #{isogclr_tempnet_loss.1} parent=1 // pred_check_branch
      %32 = sbr.rel (0) target = $region17
    $region16: #{isogclr_tempnet_loss.1} parent=1 // pred_region
      _
    $region17: #{isogclr_tempnet_loss.1} parent=1 // pred_fallthru
      _
    // Predicated region
    $region18: #{isogclr_tempnet_loss.1} parent=1 // pred_check
      _
    $region19: #{isogclr_tempnet_loss.1} parent=1 // pred_check_branch
      %34 = sbr.rel (0) target = $region21
    $region20: #{isogclr_tempnet_loss.1} parent=1 // pred_region
      _
    $region21: #{isogclr_tempnet_loss.1} parent=1 // pred_fallthru
      _
    // Predicated region
    $region22: #{isogclr_tempnet_loss.1} parent=1 // pred_check
      _
    $region23: #{isogclr_tempnet_loss.1} parent=1 // pred_check_branch
      %36 = sbr.rel (0) target = $region25
    $region24: #{isogclr_tempnet_loss.1} parent=1 // pred_region
      _
    $region25: #{isogclr_tempnet_loss.1} parent=1 // pred_fallthru
      _
    // Predicated region
    $region26: #{isogclr_tempnet_loss.1} parent=1 // pred_check
      _
    $region27: #{isogclr_tempnet_loss.1} parent=1 // pred_check_branch
      %38 = sbr.rel (0) target = $region29
    $region28: #{isogclr_tempnet_loss.1} parent=1 // pred_region
      _
    $region29: #{isogclr_tempnet_loss.1} parent=1 // pred_fallthru
      _
    // Predicated region
    $region30: #{isogclr_tempnet_loss.1} parent=1 // pred_check
      _
    $region31: #{isogclr_tempnet_loss.1} parent=1 // pred_check_branch
      %40 = sbr.rel (0) target = $region33
    $region32: #{isogclr_tempnet_loss.1} parent=1 // pred_region
      _
    $region33: #{isogclr_tempnet_loss.1} parent=1 // pred_fallthru
      _
    // Predicated region
    $region34: #{isogclr_tempnet_loss.1} parent=1 // pred_check
      _
    $region35: #{isogclr_tempnet_loss.1} parent=1 // pred_check_branch
      %42 = sbr.rel (0) target = $region37
    $region36: #{isogclr_tempnet_loss.1} parent=1 // pred_region
      _
    $region37: #{isogclr_tempnet_loss.1} parent=1 // pred_fallthru
      _
    // Predicated region
    $region38: #{isogclr_tempnet_loss.1} parent=1 // pred_check
      _
    $region39: #{isogclr_tempnet_loss.1} parent=1 // pred_check_branch
      %44 = sbr.rel (0) target = $region41
    $region40: #{isogclr_tempnet_loss.1} parent=1 // pred_region
      %45 = dma.done [#allocation5], 16
    $region41: #{isogclr_tempnet_loss.1} parent=1 // pred_fallthru
      _
    %46 = sfence
    %s48 = sld [smem:[#allocation4]]
    %s49 = sld [smem:[#allocation4 + $0x1]]
    %s50 = sld [smem:[#allocation4 + $0x2]]
    %s51 = sld [smem:[#allocation4 + $0x3]]
    %v52 = vld [vmem:[%s7] sm:$0x1]
    %v53 = vld [vmem:[%s7 + $0x1] sm:$0x1]
    %v54 = vld [vmem:[%s7 + $0x2] sm:$0x1]
    %v55 = vld [vmem:[%s7 + $0x3] sm:$0x1]
    %v56 = vld [vmem:[%s7 + $0x4] sm:$0x1]
    %v57 = vld [vmem:[%s7 + $0x5] sm:$0x1]
    %v58 = vld [vmem:[%s2] sm:$0xf]
    %v59 = vld [vmem:[%s2 + $0x4] sm:$0xf]
    %v60 = vld [vmem:[%s2 + $0x8] sm:$0xf]
    %v61 = vld [vmem:[%s2 + $0xc] sm:$0xf]
    %v62 = vld [vmem:[%s1] sm:$0xf]
    %v63 = vld [vmem:[%s1 + $0x4] sm:$0xf]
    %v64 = vld [vmem:[%s1 + $0x8] sm:$0xf]
    %v65 = vld [vmem:[%s1 + $0xc] sm:$0xf]
    %p66 = scmp.eq.s32.totalorder 0, 0
    // Predicated region
    $region42: #{isogclr_tempnet_loss.1} parent=1 // pred_check
      %p67 = pneg %p66
    $region43: #{isogclr_tempnet_loss.1} parent=1 // pred_check_branch
      %69 = sbr.rel (%p67) target = $region45
    $region44: #{isogclr_tempnet_loss.1} parent=1 // pred_region
      %v70 = vld [vmem:[%s5] sm:$0xf]
      %v71 = vld [vmem:[%s5 + $0x4] sm:$0xf]
      %v72 = vld [vmem:[%s5 + $0x8] sm:$0xf]
      %v73 = vld [vmem:[%s5 + $0xc] sm:$0xf]
      %v74 = vld [vmem:[%s5 + $0x10] sm:$0xf]
      %v75 = vld [vmem:[%s5 + $0x14] sm:$0xf]
      %v76 = vld [vmem:[%s5 + $0x18] sm:$0xf]
      %v77 = vld [vmem:[%s5 + $0x1c] sm:$0xf]
      %v78 = vld [vmem:[%s5 + $0x20] sm:$0xf]
      %v79 = vld [vmem:[%s5 + $0x24] sm:$0xf]
      %v80 = vld [vmem:[%s5 + $0x28] sm:$0xf]
      %v81 = vld [vmem:[%s5 + $0x2c] sm:$0xf]
      %v82 = vld [vmem:[%s5 + $0x30] sm:$0xf]
      %v83 = vld [vmem:[%s5 + $0x34] sm:$0xf]
      %v84 = vld [vmem:[%s5 + $0x38] sm:$0xf]
      %v85 = vld [vmem:[%s5 + $0x3c] sm:$0xf]
      %v86 = vld [vmem:[%s6] sm:$0xf]
      %v87 = vld [vmem:[%s6 + $0x4] sm:$0xf]
      %v88 = vld [vmem:[%s6 + $0x8] sm:$0xf]
      %v89 = vld [vmem:[%s6 + $0xc] sm:$0xf]
      %v90 = vlaneseq
      %v91 = vshrl.u32 %v90, 7
      %v92 = vsub.s32 0, %v91
      %v93 = vrot.slane %v55, %v92
      %v98 = vunpack.c.l.b16 %v58
      %v99 = vunpack.c.l.b16 %v59
      %v100 = vunpack.c.l.b16 %v60
      %v101 = vunpack.c.l.b16 %v61
      %v102 = vpack.c.b16 %v99, %v98
      %v103 = vpack.c.b16 %v101, %v100
      %v122 = vunpack.c.l.b16 %v70
      %v123 = vunpack.c.l.b16 %v71
      %v124 = vunpack.c.l.b16 %v72
      %v125 = vunpack.c.l.b16 %v73
      %v126 = vunpack.c.l.b16 %v74
      %v127 = vunpack.c.l.b16 %v75
      %v128 = vunpack.c.l.b16 %v76
      %v129 = vunpack.c.l.b16 %v77
      %v130 = vunpack.c.l.b16 %v78
      %v131 = vunpack.c.l.b16 %v79
      %v132 = vunpack.c.l.b16 %v80
      %v133 = vunpack.c.l.b16 %v81
      %v134 = vunpack.c.l.b16 %v82
      %v135 = vunpack.c.l.b16 %v83
      %v136 = vunpack.c.l.b16 %v84
      %v137 = vunpack.c.l.b16 %v85
      %v138 = vpack.c.b16 %v123, %v122
      %v139 = vpack.c.b16 %v125, %v124
      %v140 = vpack.c.b16 %v127, %v126
      %v141 = vpack.c.b16 %v129, %v128
      %v142 = vpack.c.b16 %v131, %v130
      %v143 = vpack.c.b16 %v133, %v132
      %v144 = vpack.c.b16 %v135, %v134
      %v145 = vpack.c.b16 %v137, %v136
      %154 = vmatprep.subr.bf16.mxu0 0
      %155 = vmatpush1.bf16.xpose.msra.mxu0 %v145
      %156 = vmatprep.subr.bf16.mxu0 0
      %157 = vmatpush1.bf16.xpose.msra.mxu0 %v144
      %158 = vmatprep.subr.bf16.mxu0 0
      %159 = vmatpush1.bf16.xpose.msra.mxu0 %v143
      %160 = vmatprep.subr.bf16.mxu0 0
      %161 = vmatpush1.bf16.xpose.msra.mxu0 %v142
      %162 = vmatprep.subr.bf16.mxu0 0
      %163 = vmatpush1.bf16.xpose.msra.mxu0 %v141
      %164 = vmatprep.subr.bf16.mxu0 0
      %165 = vmatpush1.bf16.xpose.msra.mxu0 %v140
      %166 = vmatprep.subr.bf16.mxu0 0
      %167 = vmatpush1.bf16.xpose.msra.mxu0 %v139
      %168 = vmatprep.subr.bf16.mxu0 0
      %169 = vmatpush1.bf16.xpose.msra.mxu0 %v138
      %170 = vmatprep.subr.bf16.mxu0 0
      %171 = vmatpush2.bf16.xpose.msra.mxu0 0
      %172 = vmatprep.subr.bf16.mxu0 0
      %173 = vmatpush2.bf16.xpose.msra.mxu0 0
      %174 = vmatprep.subr.bf16.mxu0 0
      %175 = vmatpush2.bf16.xpose.msra.mxu0 0
      %176 = vmatprep.subr.bf16.mxu0 0
      %177 = vmatpush2.bf16.xpose.msra.mxu0 0
      %178 = vmatprep.subr.bf16.mxu0 0
      %179 = vmatpush2.bf16.xpose.msra.mxu0 0
      %180 = vmatprep.subr.bf16.mxu0 0
      %181 = vmatpush2.bf16.xpose.msra.mxu0 0
      %182 = vmatprep.subr.bf16.mxu0 0
      %183 = vmatpush2.bf16.xpose.msra.mxu0 0
      %184 = vmatprep.subr.bf16.mxu0 0
      %185 = vmatpush2.bf16.xpose.msra.mxu0 0
      %186 = vmatprep.mubr.bf16.mxu0 0
      %187 = vmatmul.mubr.bf16.gmra.mxu0 %v102
      %v188 = vpop.f32.mrf.mxu0
      %v189 = vadd.f32 %v93, %v188
      %v190 = vpop.f32.mrf.mxu0
      %v191 = vpop.f32.mrf.mxu0
      %v192 = vadd.f32 %v93, %v191
      %v193 = vpop.f32.mrf.mxu0
      %194 = vmatprep.mubr.bf16.mxu0 0
      %195 = vmatmul.mubr.bf16.gmra.mxu0 %v103
      %v196 = vpop.f32.mrf.mxu0
      %v197 = vadd.f32 %v93, %v196
      %v198 = vpop.f32.mrf.mxu0
      %v199 = vpop.f32.mrf.mxu0
      %v200 = vadd.f32 %v93, %v199
      %v201 = vpop.f32.mrf.mxu0
      %202 = vdwg.mxu0
      %v203 = vmul.f32 %v189, 0.5
      %v204 = vmul.f32 %v192, 0.5
      %v205 = vmul.f32 %v197, 0.5
      %v206 = vmul.f32 %v200, 0.5
      %v207 = vtanh.pop %v203
      %v208 = vtanh.pop %v204
      %v209 = vtanh.pop %v205
      %v210 = vtanh.pop %v206
      %v211 = vadd.f32 %v207, 1.0
      %v212 = vadd.f32 %v208, 1.0
      %v213 = vadd.f32 %v209, 1.0
      %v214 = vadd.f32 %v210, 1.0
      %v215 = vmul.f32 %v211, 0.5
      %v216 = vmul.f32 %v212, 0.5
      %v217 = vmul.f32 %v213, 0.5
      %v218 = vmul.f32 %v214, 0.5
      %v219 = vpack.c.bf16 %v216, %v215
      %v220 = vpack.c.bf16 %v218, %v217
      %v225 = vunpack.c.l.b16 %v86
      %v226 = vunpack.c.l.b16 %v87
      %v227 = vunpack.c.l.b16 %v88
      %v228 = vunpack.c.l.b16 %v89
      %v229 = vpack.c.b16 %v226, %v225
      %v230 = vpack.c.b16 %v228, %v227
      %233 = vmatprep.subr.bf16.mxu0 0
      %234 = vmatpush1.bf16.xpose.msra.mxu0 0
      %235 = vmatprep.subr.bf16.mxu0 0
      %236 = vmatpush1.bf16.xpose.msra.mxu0 0
      %237 = vmatprep.subr.bf16.mxu0 0
      %238 = vmatpush1.bf16.xpose.msra.mxu0 0
      %239 = vmatprep.subr.bf16.mxu0 0
      %240 = vmatpush1.bf16.xpose.msra.mxu0 0
      %241 = vmatprep.subr.bf16.mxu0 0
      %242 = vmatpush1.bf16.xpose.msra.mxu0 0
      %243 = vmatprep.subr.bf16.mxu0 0
      %244 = vmatpush1.bf16.xpose.msra.mxu0 0
      %245 = vmatprep.subr.bf16.mxu0 0
      %246 = vmatpush1.bf16.xpose.msra.mxu0 %v230
      %247 = vmatprep.subr.bf16.mxu0 0
      %248 = vmatpush1.bf16.xpose.msra.mxu0 %v229
      %249 = vmatprep.subr.bf16.mxu0 0
      %250 = vmatpush2.bf16.xpose.msra.mxu0 0
      %251 = vmatprep.subr.bf16.mxu0 0
      %252 = vmatpush2.bf16.xpose.msra.mxu0 0
      %253 = vmatprep.subr.bf16.mxu0 0
      %254 = vmatpush2.bf16.xpose.msra.mxu0 0
      %255 = vmatprep.subr.bf16.mxu0 0
      %256 = vmatpush2.bf16.xpose.msra.mxu0 0
      %257 = vmatprep.subr.bf16.mxu0 0
      %258 = vmatpush2.bf16.xpose.msra.mxu0 0
      %259 = vmatprep.subr.bf16.mxu0 0
      %260 = vmatpush2.bf16.xpose.msra.mxu0 0
      %261 = vmatprep.subr.bf16.mxu0 0
      %262 = vmatpush2.bf16.xpose.msra.mxu0 0
      %263 = vmatprep.subr.bf16.mxu0 0
      %264 = vmatpush2.bf16.xpose.msra.mxu0 0
      %265 = vmatprep.mubr.bf16.mxu0 0
      %266 = vmatmul.mubr.bf16.gmra.mxu0 %v219
      %v267 = vpop.f32.mrf.mxu0
      %v268 = vadd.f32 0.0, %v267
      %v269 = vpop.f32.mrf.mxu0
      %v270 = vpop.f32.mrf.mxu0
      %v271 = vadd.f32 0.0, %v270
      %v272 = vpop.f32.mrf.mxu0
      %273 = vmatprep.mubr.bf16.mxu0 0
      %274 = vmatmul.mubr.bf16.gmra.mxu0 %v220
      %v275 = vpop.f32.mrf.mxu0
      %v276 = vadd.f32 0.0, %v275
      %v277 = vpop.f32.mrf.mxu0
      %v278 = vpop.f32.mrf.mxu0
      %v279 = vadd.f32 0.0, %v278
      %v280 = vpop.f32.mrf.mxu0
      %281 = vdwg.mxu0
      %v282 = vstv %s50
      %v283 = vmul.f32 %v268, %v282
      %v284 = vmul.f32 %v271, %v282
      %v285 = vmul.f32 %v276, %v282
      %v286 = vmul.f32 %v279, %v282
      %vm287 = vcmask 261120
      %v288 = vsel %vm287, %v283, -inf
      %289 = vmax.xlane.f32.xlu0 %v288
      %v290 = vpop.xlane.xlu0 %289
      %v291 = vsel %vm287, %v284, -inf
      %292 = vmax.xlane.f32.xlu0 %v291
      %v293 = vpop.xlane.xlu0 %292
      %v294 = vsel %vm287, %v285, -inf
      %295 = vmax.xlane.f32.xlu0 %v294
      %v296 = vpop.xlane.xlu0 %295
      %v297 = vsel %vm287, %v286, -inf
      %298 = vmax.xlane.f32.xlu0 %v297
      %v299 = vpop.xlane.xlu0 %298
      %v300 = vsub.f32 %v283, %v290
      %v301 = vsub.f32 %v284, %v293
      %v302 = vsub.f32 %v285, %v296
      %v303 = vsub.f32 %v286, %v299
      %v304 = vmul.f32 %v300, 1.442695
      %v305 = vpow.pop %v304
      %v306 = vmul.f32 %v301, 1.442695
      %v307 = vpow.pop %v306
      %v308 = vmul.f32 %v302, 1.442695
      %v309 = vpow.pop %v308
      %v310 = vmul.f32 %v303, 1.442695
      %v311 = vpow.pop %v310
      %v312 = vsel %vm287, %v305, 0.0
      %313 = vadd.xlane.f32.xlu0 %v312
      %v314 = vpop.xlane.xlu0 %313
      %v315 = vsel %vm287, %v307, 0.0
      %316 = vadd.xlane.f32.xlu0 %v315
      %v317 = vpop.xlane.xlu0 %316
      %v318 = vsel %vm287, %v309, 0.0
      %319 = vadd.xlane.f32.xlu0 %v318
      %v320 = vpop.xlane.xlu0 %319
      %v321 = vsel %vm287, %v311, 0.0
      %322 = vadd.xlane.f32.xlu0 %v321
      %v323 = vpop.xlane.xlu0 %322
      %v324 = vrcp.pop %v314
      %v325 = vrcp.pop %v317
      %v326 = vrcp.pop %v320
      %v327 = vrcp.pop %v323
      %v328 = vmul.f32 %v305, %v324
      %v329 = vmul.f32 %v307, %v325
      %v330 = vmul.f32 %v309, %v326
      %v331 = vmul.f32 %v311, %v327
      %v332 = vmul.f32 %v268, 0.5
      %v333 = vmul.f32 %v271, 0.5
      %v334 = vmul.f32 %v276, 0.5
      %v335 = vmul.f32 %v279, 0.5
      %v336 = vtanh.pop %v332
      %v337 = vtanh.pop %v333
      %v338 = vtanh.pop %v334
      %v339 = vtanh.pop %v335
      %v340 = vadd.f32 %v336, 1.0
      %v341 = vadd.f32 %v337, 1.0
      %v342 = vadd.f32 %v338, 1.0
      %v343 = vadd.f32 %v339, 1.0
      %v344 = vmul.f32 %v340, 0.5
      %v345 = vmul.f32 %v341, 0.5
      %v346 = vmul.f32 %v342, 0.5
      %v347 = vmul.f32 %v343, 0.5
      %v348 = vmul.f32 %v328, %v344
      %v349 = vmul.f32 %v329, %v345
      %v350 = vmul.f32 %v330, %v346
      %v351 = vmul.f32 %v331, %v347
      %v352 = vlaneseq
      %v353 = vshrl.u32 %v352, 7
      %v354 = vsub.s32 0, %v353
      %v355 = vrot.slane %v56, %v354
      %v356 = vmul.f32 %v348, %v355
      %v357 = vmul.f32 %v349, %v355
      %v358 = vmul.f32 %v350, %v355
      %v359 = vmul.f32 %v351, %v355
      %v360 = vsel %vm287, %v356, 0.0
      %361 = vadd.xlane.f32.xlu0 %v360
      %v362 = vpop.xlane.xlu0 %361
      %v363 = vsel %vm287, %v357, 0.0
      %364 = vadd.xlane.f32.xlu0 %v363
      %v365 = vpop.xlane.xlu0 %364
      %v366 = vsel %vm287, %v358, 0.0
      %367 = vadd.xlane.f32.xlu0 %v366
      %v368 = vpop.xlane.xlu0 %367
      %v369 = vsel %vm287, %v359, 0.0
      %370 = vadd.xlane.f32.xlu0 %v369
      %v371 = vpop.xlane.xlu0 %370
      %v372 = vstv %s51
      %v373 = vadd.f32 %v362, %v372
      %v374 = vadd.f32 %v365, %v372
      %v375 = vadd.f32 %v368, %v372
      %v376 = vadd.f32 %v371, %v372
      %v377 = vlaneseq
      %v378 = vshrl.u32 %v377, 7
      %v379 = vsub.s32 0, %v378
      %v380 = vrot.slane %v57, %v379
      %v381 = vmul.f32 %v344, %v380
      %v382 = vmul.f32 %v345, %v380
      %v383 = vmul.f32 %v346, %v380
      %v384 = vmul.f32 %v347, %v380
      %v385 = vsel %vm287, %v381, 0.0
      %386 = vadd.xlane.f32.xlu0 %v385
      %v387 = vpop.xlane.xlu0 %386
      %v388 = vsel %vm287, %v382, 0.0
      %389 = vadd.xlane.f32.xlu0 %v388
      %v390 = vpop.xlane.xlu0 %389
      %v391 = vsel %vm287, %v383, 0.0
      %392 = vadd.xlane.f32.xlu0 %v391
      %v393 = vpop.xlane.xlu0 %392
      %v394 = vsel %vm287, %v384, 0.0
      %395 = vadd.xlane.f32.xlu0 %v394
      %v396 = vpop.xlane.xlu0 %395
      %v397 = vmul.f32 %v387, 0.03125
      %v398 = vmul.f32 %v390, 0.03125
      %v399 = vmul.f32 %v393, 0.03125
      %v400 = vmul.f32 %v396, 0.03125
      %v401 = vsub.f32 %v373, %v397
      %v402 = vsub.f32 %v374, %v398
      %v403 = vsub.f32 %v375, %v399
      %v404 = vsub.f32 %v376, %v400
      %v405 = vmul.f32 %v401, 0.125
      %v406 = vmul.f32 %v402, 0.125
      %v407 = vmul.f32 %v403, 0.125
      %v408 = vmul.f32 %v404, 0.125
      %v409 = vmax.f32 %v405, 0.001
      %v410 = vmax.f32 %v406, 0.001
      %v411 = vmax.f32 %v407, 0.001
      %v412 = vmax.f32 %v408, 0.001
      %v417 = vlaneseq
      %v418 = vand.u32 %v417, 127
      %v419 = vlaneseq
      %v420 = vshrl.u32 %v419, 7
      %v421 = vsub.s32 %v418, %v420
      %v422 = vrot.slane %v409, %v421
      %v423 = vadd.s32 %v418, 4294967288
      %v424 = vlaneseq
      %v425 = vshrl.u32 %v424, 7
      %v426 = vsub.s32 %v423, %v425
      %v427 = vrot.slane %v410, %v426
      %vm428 = vcmask 130112
      %v429 = vsel %vm428, %v427, %v422
      %v430 = vadd.s32 %v418, 4294967280
      %v431 = vlaneseq
      %v432 = vshrl.u32 %v431, 7
      %v433 = vsub.s32 %v430, %v432
      %v434 = vrot.slane %v411, %v433
      %vm435 = vcmask 195712
      %v436 = vsel %vm435, %v434, %v429
      %v437 = vadd.s32 %v418, 4294967272
      %v438 = vlaneseq
      %v439 = vshrl.u32 %v438, 7
      %v440 = vsub.s32 %v437, %v439
      %v441 = vrot.slane %v412, %v440
      %vm442 = vcmask 261312
      %v443 = vsel %vm442, %v441, %v436
      %vm445 = vcmask 253952
      %446 = vst.msk [vmem:[#allocation2] sm:$0x1] %vm445, %v443
      %v447 = vrcp.pop %v409
      %v448 = vmul.f32 1.0, %v447
      %v449 = vrcp.pop %v410
      %v450 = vmul.f32 1.0, %v449
      %v451 = vrcp.pop %v411
      %v452 = vmul.f32 1.0, %v451
      %v453 = vrcp.pop %v412
      %v454 = vmul.f32 1.0, %v453
      %v459 = vlaneseq
      %v460 = vshrl.u32 %v459, 7
      %v461 = vsub.s32 %v418, %v460
      %v462 = vrot.slane %v448, %v461
      %v463 = vlaneseq
      %v464 = vshrl.u32 %v463, 7
      %v465 = vsub.s32 %v423, %v464
      %v466 = vrot.slane %v450, %v465
      %v467 = vsel %vm428, %v466, %v462
      %v468 = vlaneseq
      %v469 = vshrl.u32 %v468, 7
      %v470 = vsub.s32 %v430, %v469
      %v471 = vrot.slane %v452, %v470
      %v472 = vsel %vm435, %v471, %v467
      %v473 = vlaneseq
      %v474 = vshrl.u32 %v473, 7
      %v475 = vsub.s32 %v437, %v474
      %v476 = vrot.slane %v454, %v475
      %v477 = vsel %vm442, %v476, %v472
      %479 = vst.msk [vmem:[#allocation2 + $0x1] sm:$0x1] %vm445, %v477
      %480 = vst.msk [vmem:[#allocation3] sm:$0x1] %vm445, -1e+30
      %481 = vst.msk [vmem:[#allocation3 + $0x1] sm:$0x1] %vm445, 0.0
      %482 = vst.msk [vmem:[#allocation3 + $0x2] sm:$0x1] %vm445, 0.0
    $region45: #{isogclr_tempnet_loss.1} parent=1 // pred_fallthru
      _
    %v487 = vunpack.c.l.b16 %v62
    %v488 = vunpack.c.l.b16 %v63
    %v489 = vunpack.c.l.b16 %v64
    %v490 = vunpack.c.l.b16 %v65
    %v491 = vpack.c.b16 %v488, %v487
    %v492 = vpack.c.b16 %v490, %v489
    %v499 = vunpack.c.l.b16 %v58
    %v500 = vunpack.c.l.b16 %v59
    %v501 = vunpack.c.l.b16 %v60
    %v502 = vunpack.c.l.b16 %v61
    %v503 = vpack.c.b16 %v500, %v499
    %v504 = vpack.c.b16 %v502, %v501
    %507 = vmatprep.subr.bf16.mxu0 0
    %508 = vmatpush1.bf16.xpose.msra.mxu0 0
    %509 = vmatprep.subr.bf16.mxu0 0
    %510 = vmatpush1.bf16.xpose.msra.mxu0 0
    %511 = vmatprep.subr.bf16.mxu0 0
    %512 = vmatpush1.bf16.xpose.msra.mxu0 0
    %513 = vmatprep.subr.bf16.mxu0 0
    %514 = vmatpush1.bf16.xpose.msra.mxu0 0
    %515 = vmatprep.subr.bf16.mxu0 0
    %516 = vmatpush1.bf16.xpose.msra.mxu0 0
    %517 = vmatprep.subr.bf16.mxu0 0
    %518 = vmatpush1.bf16.xpose.msra.mxu0 0
    %519 = vmatprep.subr.bf16.mxu0 0
    %520 = vmatpush1.bf16.xpose.msra.mxu0 %v504
    %521 = vmatprep.subr.bf16.mxu0 0
    %522 = vmatpush1.bf16.xpose.msra.mxu0 %v503
    %523 = vmatprep.subr.bf16.mxu0 0
    %524 = vmatpush2.bf16.xpose.msra.mxu0 0
    %525 = vmatprep.subr.bf16.mxu0 0
    %526 = vmatpush2.bf16.xpose.msra.mxu0 0
    %527 = vmatprep.subr.bf16.mxu0 0
    %528 = vmatpush2.bf16.xpose.msra.mxu0 0
    %529 = vmatprep.subr.bf16.mxu0 0
    %530 = vmatpush2.bf16.xpose.msra.mxu0 0
    %531 = vmatprep.subr.bf16.mxu0 0
    %532 = vmatpush2.bf16.xpose.msra.mxu0 0
    %533 = vmatprep.subr.bf16.mxu0 0
    %534 = vmatpush2.bf16.xpose.msra.mxu0 0
    %535 = vmatprep.subr.bf16.mxu0 0
    %536 = vmatpush2.bf16.xpose.msra.mxu0 0
    %537 = vmatprep.subr.bf16.mxu0 0
    %538 = vmatpush2.bf16.xpose.msra.mxu0 0
    %539 = vmatprep.mubr.bf16.mxu0 0
    %540 = vmatmul.mubr.bf16.gmra.mxu0 %v491
    %v541 = vpop.f32.mrf.mxu0
    %v542 = vadd.f32 0.0, %v541
    %v543 = vpop.f32.mrf.mxu0
    %v544 = vpop.f32.mrf.mxu0
    %v545 = vadd.f32 0.0, %v544
    %v546 = vpop.f32.mrf.mxu0
    %547 = vmatprep.mubr.bf16.mxu0 0
    %548 = vmatmul.mubr.bf16.gmra.mxu0 %v492
    %v549 = vpop.f32.mrf.mxu0
    %v550 = vadd.f32 0.0, %v549
    %v551 = vpop.f32.mrf.mxu0
    %v552 = vpop.f32.mrf.mxu0
    %v553 = vadd.f32 0.0, %v552
    %v554 = vpop.f32.mrf.mxu0
    %555 = vdwg.mxu0
    %s556 = smul.u32 0, 32
    %v557 = vlaneseq
    %v558 = vshrl.u32 %v557, 7
    %v559 = vadd.s32 %v558, 8
    %v560 = vadd.s32 %v558, 16
    %v561 = vadd.s32 %v558, 24
    %v562 = vstv %s556
    %v563 = vadd.s32 %v562, %v558
    %v564 = vadd.s32 %v562, %v559
    %v565 = vadd.s32 %v562, %v560
    %v566 = vadd.s32 %v562, %v561
    %v567 = vlaneseq
    %v568 = vand.u32 %v567, 127
    %vm569 = vcmp.eq.s32.totalorder %v568, %v563
    %vm570 = vcmp.eq.s32.totalorder %v568, %v564
    %vm571 = vcmp.eq.s32.totalorder %v568, %v565
    %vm572 = vcmp.eq.s32.totalorder %v568, %v566
    %v573 = vsel %vm569, %v542, 0.0
    %v574 = vsel %vm570, %v545, 0.0
    %v575 = vsel %vm571, %v550, 0.0
    %v576 = vsel %vm572, %v553, 0.0
    %vm577 = vcmask 261120
    %v578 = vsel %vm577, %v573, 0.0
    %579 = vadd.xlane.f32.xlu0 %v578
    %v580 = vpop.xlane.xlu0 %579
    %v581 = vsel %vm577, %v574, 0.0
    %582 = vadd.xlane.f32.xlu0 %v581
    %v583 = vpop.xlane.xlu0 %582
    %v584 = vsel %vm577, %v575, 0.0
    %585 = vadd.xlane.f32.xlu0 %v584
    %v586 = vpop.xlane.xlu0 %585
    %v587 = vsel %vm577, %v576, 0.0
    %588 = vadd.xlane.f32.xlu0 %v587
    %v589 = vpop.xlane.xlu0 %588
    %v590 = vld [vmem:[%s3] sm:$0xf]
    %v591 = vld [vmem:[%s3 + $0x4] sm:$0xf]
    %v592 = vld [vmem:[%s3 + $0x8] sm:$0xf]
    %v593 = vld [vmem:[%s3 + $0xc] sm:$0xf]
    %v594 = vld [vmem:[%s3 + $0x10] sm:$0xf]
    %v595 = vld [vmem:[%s3 + $0x14] sm:$0xf]
    %v596 = vld [vmem:[%s3 + $0x18] sm:$0xf]
    %v597 = vld [vmem:[%s3 + $0x1c] sm:$0xf]
    %v598 = vld [vmem:[%s3 + $0x20] sm:$0xf]
    %v599 = vld [vmem:[%s3 + $0x24] sm:$0xf]
    %v600 = vld [vmem:[%s3 + $0x28] sm:$0xf]
    %v601 = vld [vmem:[%s3 + $0x2c] sm:$0xf]
    %v602 = vld [vmem:[%s3 + $0x30] sm:$0xf]
    %v603 = vld [vmem:[%s3 + $0x34] sm:$0xf]
    %v604 = vld [vmem:[%s3 + $0x38] sm:$0xf]
    %v605 = vld [vmem:[%s3 + $0x3c] sm:$0xf]
    %v606 = vld [vmem:[%s4] sm:$0xf]
    %v607 = vld [vmem:[%s4 + $0x4] sm:$0xf]
    %v608 = vld [vmem:[%s4 + $0x8] sm:$0xf]
    %v609 = vld [vmem:[%s4 + $0xc] sm:$0xf]
    %v610 = vlaneseq
    %v611 = vshrl.u32 %v610, 7
    %v612 = vsub.s32 0, %v611
    %v613 = vrot.slane %v52, %v612
    %v630 = vunpack.c.l.b16 %v590
    %v631 = vunpack.c.l.b16 %v591
    %v632 = vunpack.c.l.b16 %v592
    %v633 = vunpack.c.l.b16 %v593
    %v634 = vunpack.c.l.b16 %v594
    %v635 = vunpack.c.l.b16 %v595
    %v636 = vunpack.c.l.b16 %v596
    %v637 = vunpack.c.l.b16 %v597
    %v638 = vunpack.c.l.b16 %v598
    %v639 = vunpack.c.l.b16 %v599
    %v640 = vunpack.c.l.b16 %v600
    %v641 = vunpack.c.l.b16 %v601
    %v642 = vunpack.c.l.b16 %v602
    %v643 = vunpack.c.l.b16 %v603
    %v644 = vunpack.c.l.b16 %v604
    %v645 = vunpack.c.l.b16 %v605
    %v646 = vpack.c.b16 %v631, %v630
    %v647 = vpack.c.b16 %v633, %v632
    %v648 = vpack.c.b16 %v635, %v634
    %v649 = vpack.c.b16 %v637, %v636
    %v650 = vpack.c.b16 %v639, %v638
    %v651 = vpack.c.b16 %v641, %v640
    %v652 = vpack.c.b16 %v643, %v642
    %v653 = vpack.c.b16 %v645, %v644
    %662 = vmatprep.subr.bf16.mxu0 0
    %663 = vmatpush1.bf16.xpose.msra.mxu0 %v653
    %664 = vmatprep.subr.bf16.mxu0 0
    %665 = vmatpush1.bf16.xpose.msra.mxu0 %v652
    %666 = vmatprep.subr.bf16.mxu0 0
    %667 = vmatpush1.bf16.xpose.msra.mxu0 %v651
    %668 = vmatprep.subr.bf16.mxu0 0
    %669 = vmatpush1.bf16.xpose.msra.mxu0 %v650
    %670 = vmatprep.subr.bf16.mxu0 0
    %671 = vmatpush1.bf16.xpose.msra.mxu0 %v649
    %672 = vmatprep.subr.bf16.mxu0 0
    %673 = vmatpush1.bf16.xpose.msra.mxu0 %v648
    %674 = vmatprep.subr.bf16.mxu0 0
    %675 = vmatpush1.bf16.xpose.msra.mxu0 %v647
    %676 = vmatprep.subr.bf16.mxu0 0
    %677 = vmatpush1.bf16.xpose.msra.mxu0 %v646
    %678 = vmatprep.subr.bf16.mxu0 0
    %679 = vmatpush2.bf16.xpose.msra.mxu0 0
    %680 = vmatprep.subr.bf16.mxu0 0
    %681 = vmatpush2.bf16.xpose.msra.mxu0 0
    %682 = vmatprep.subr.bf16.mxu0 0
    %683 = vmatpush2.bf16.xpose.msra.mxu0 0
    %684 = vmatprep.subr.bf16.mxu0 0
    %685 = vmatpush2.bf16.xpose.msra.mxu0 0
    %686 = vmatprep.subr.bf16.mxu0 0
    %687 = vmatpush2.bf16.xpose.msra.mxu0 0
    %688 = vmatprep.subr.bf16.mxu0 0
    %689 = vmatpush2.bf16.xpose.msra.mxu0 0
    %690 = vmatprep.subr.bf16.mxu0 0
    %691 = vmatpush2.bf16.xpose.msra.mxu0 0
    %692 = vmatprep.subr.bf16.mxu0 0
    %693 = vmatpush2.bf16.xpose.msra.mxu0 0
    %694 = vmatprep.mubr.bf16.mxu0 0
    %695 = vmatmul.mubr.bf16.gmra.mxu0 %v491
    %v696 = vpop.f32.mrf.mxu0
    %v697 = vadd.f32 %v613, %v696
    %v698 = vpop.f32.mrf.mxu0
    %v699 = vpop.f32.mrf.mxu0
    %v700 = vadd.f32 %v613, %v699
    %v701 = vpop.f32.mrf.mxu0
    %702 = vmatprep.mubr.bf16.mxu0 0
    %703 = vmatmul.mubr.bf16.gmra.mxu0 %v492
    %v704 = vpop.f32.mrf.mxu0
    %v705 = vadd.f32 %v613, %v704
    %v706 = vpop.f32.mrf.mxu0
    %v707 = vpop.f32.mrf.mxu0
    %v708 = vadd.f32 %v613, %v707
    %v709 = vpop.f32.mrf.mxu0
    %710 = vdwg.mxu0
    %v711 = vmul.f32 %v697, 0.5
    %v712 = vmul.f32 %v700, 0.5
    %v713 = vmul.f32 %v705, 0.5
    %v714 = vmul.f32 %v708, 0.5
    %v715 = vtanh.pop %v711
    %v716 = vtanh.pop %v712
    %v717 = vtanh.pop %v713
    %v718 = vtanh.pop %v714
    %v719 = vadd.f32 %v715, 1.0
    %v720 = vadd.f32 %v716, 1.0
    %v721 = vadd.f32 %v717, 1.0
    %v722 = vadd.f32 %v718, 1.0
    %v723 = vmul.f32 %v719, 0.5
    %v724 = vmul.f32 %v720, 0.5
    %v725 = vmul.f32 %v721, 0.5
    %v726 = vmul.f32 %v722, 0.5
    %v727 = vpack.c.bf16 %v724, %v723
    %v728 = vpack.c.bf16 %v726, %v725
    %v733 = vunpack.c.l.b16 %v606
    %v734 = vunpack.c.l.b16 %v607
    %v735 = vunpack.c.l.b16 %v608
    %v736 = vunpack.c.l.b16 %v609
    %v737 = vpack.c.b16 %v734, %v733
    %v738 = vpack.c.b16 %v736, %v735
    %741 = vmatprep.subr.bf16.mxu0 0
    %742 = vmatpush1.bf16.xpose.msra.mxu0 0
    %743 = vmatprep.subr.bf16.mxu0 0
    %744 = vmatpush1.bf16.xpose.msra.mxu0 0
    %745 = vmatprep.subr.bf16.mxu0 0
    %746 = vmatpush1.bf16.xpose.msra.mxu0 0
    %747 = vmatprep.subr.bf16.mxu0 0
    %748 = vmatpush1.bf16.xpose.msra.mxu0 0
    %749 = vmatprep.subr.bf16.mxu0 0
    %750 = vmatpush1.bf16.xpose.msra.mxu0 0
    %751 = vmatprep.subr.bf16.mxu0 0
    %752 = vmatpush1.bf16.xpose.msra.mxu0 0
    %753 = vmatprep.subr.bf16.mxu0 0
    %754 = vmatpush1.bf16.xpose.msra.mxu0 %v738
    %755 = vmatprep.subr.bf16.mxu0 0
    %756 = vmatpush1.bf16.xpose.msra.mxu0 %v737
    %757 = vmatprep.subr.bf16.mxu0 0
    %758 = vmatpush2.bf16.xpose.msra.mxu0 0
    %759 = vmatprep.subr.bf16.mxu0 0
    %760 = vmatpush2.bf16.xpose.msra.mxu0 0
    %761 = vmatprep.subr.bf16.mxu0 0
    %762 = vmatpush2.bf16.xpose.msra.mxu0 0
    %763 = vmatprep.subr.bf16.mxu0 0
    %764 = vmatpush2.bf16.xpose.msra.mxu0 0
    %765 = vmatprep.subr.bf16.mxu0 0
    %766 = vmatpush2.bf16.xpose.msra.mxu0 0
    %767 = vmatprep.subr.bf16.mxu0 0
    %768 = vmatpush2.bf16.xpose.msra.mxu0 0
    %769 = vmatprep.subr.bf16.mxu0 0
    %770 = vmatpush2.bf16.xpose.msra.mxu0 0
    %771 = vmatprep.subr.bf16.mxu0 0
    %772 = vmatpush2.bf16.xpose.msra.mxu0 0
    %773 = vmatprep.mubr.bf16.mxu0 0
    %774 = vmatmul.mubr.bf16.gmra.mxu0 %v727
    %v775 = vpop.f32.mrf.mxu0
    %v776 = vadd.f32 0.0, %v775
    %v777 = vpop.f32.mrf.mxu0
    %v778 = vpop.f32.mrf.mxu0
    %v779 = vadd.f32 0.0, %v778
    %v780 = vpop.f32.mrf.mxu0
    %781 = vmatprep.mubr.bf16.mxu0 0
    %782 = vmatmul.mubr.bf16.gmra.mxu0 %v728
    %v783 = vpop.f32.mrf.mxu0
    %v784 = vadd.f32 0.0, %v783
    %v785 = vpop.f32.mrf.mxu0
    %v786 = vpop.f32.mrf.mxu0
    %v787 = vadd.f32 0.0, %v786
    %v788 = vpop.f32.mrf.mxu0
    %789 = vdwg.mxu0
    %v790 = vstv %s48
    %v791 = vmul.f32 %v776, %v790
    %v792 = vmul.f32 %v779, %v790
    %v793 = vmul.f32 %v784, %v790
    %v794 = vmul.f32 %v787, %v790
    %v795 = vsel %vm577, %v791, -inf
    %796 = vmax.xlane.f32.xlu0 %v795
    %v797 = vpop.xlane.xlu0 %796
    %v798 = vsel %vm577, %v792, -inf
    %799 = vmax.xlane.f32.xlu0 %v798
    %v800 = vpop.xlane.xlu0 %799
    %v801 = vsel %vm577, %v793, -inf
    %802 = vmax.xlane.f32.xlu0 %v801
    %v803 = vpop.xlane.xlu0 %802
    %v804 = vsel %vm577, %v794, -inf
    %805 = vmax.xlane.f32.xlu0 %v804
    %v806 = vpop.xlane.xlu0 %805
    %v807 = vsub.f32 %v791, %v797
    %v808 = vsub.f32 %v792, %v800
    %v809 = vsub.f32 %v793, %v803
    %v810 = vsub.f32 %v794, %v806
    %v811 = vmul.f32 %v807, 1.442695
    %v812 = vpow.pop %v811
    %v813 = vmul.f32 %v808, 1.442695
    %v814 = vpow.pop %v813
    %v815 = vmul.f32 %v809, 1.442695
    %v816 = vpow.pop %v815
    %v817 = vmul.f32 %v810, 1.442695
    %v818 = vpow.pop %v817
    %v819 = vsel %vm577, %v812, 0.0
    %820 = vadd.xlane.f32.xlu0 %v819
    %v821 = vpop.xlane.xlu0 %820
    %v822 = vsel %vm577, %v814, 0.0
    %823 = vadd.xlane.f32.xlu0 %v822
    %v824 = vpop.xlane.xlu0 %823
    %v825 = vsel %vm577, %v816, 0.0
    %826 = vadd.xlane.f32.xlu0 %v825
    %v827 = vpop.xlane.xlu0 %826
    %v828 = vsel %vm577, %v818, 0.0
    %829 = vadd.xlane.f32.xlu0 %v828
    %v830 = vpop.xlane.xlu0 %829
    %v831 = vrcp.pop %v821
    %v832 = vrcp.pop %v824
    %v833 = vrcp.pop %v827
    %v834 = vrcp.pop %v830
    %v835 = vmul.f32 %v812, %v831
    %v836 = vmul.f32 %v814, %v832
    %v837 = vmul.f32 %v816, %v833
    %v838 = vmul.f32 %v818, %v834
    %v839 = vmul.f32 %v776, 0.5
    %v840 = vmul.f32 %v779, 0.5
    %v841 = vmul.f32 %v784, 0.5
    %v842 = vmul.f32 %v787, 0.5
    %v843 = vtanh.pop %v839
    %v844 = vtanh.pop %v840
    %v845 = vtanh.pop %v841
    %v846 = vtanh.pop %v842
    %v847 = vadd.f32 %v843, 1.0
    %v848 = vadd.f32 %v844, 1.0
    %v849 = vadd.f32 %v845, 1.0
    %v850 = vadd.f32 %v846, 1.0
    %v851 = vmul.f32 %v847, 0.5
    %v852 = vmul.f32 %v848, 0.5
    %v853 = vmul.f32 %v849, 0.5
    %v854 = vmul.f32 %v850, 0.5
    %v855 = vmul.f32 %v835, %v851
    %v856 = vmul.f32 %v836, %v852
    %v857 = vmul.f32 %v837, %v853
    %v858 = vmul.f32 %v838, %v854
    %v859 = vlaneseq
    %v860 = vshrl.u32 %v859, 7
    %v861 = vsub.s32 0, %v860
    %v862 = vrot.slane %v53, %v861
    %v863 = vmul.f32 %v855, %v862
    %v864 = vmul.f32 %v856, %v862
    %v865 = vmul.f32 %v857, %v862
    %v866 = vmul.f32 %v858, %v862
    %v867 = vsel %vm577, %v863, 0.0
    %868 = vadd.xlane.f32.xlu0 %v867
    %v869 = vpop.xlane.xlu0 %868
    %v870 = vsel %vm577, %v864, 0.0
    %871 = vadd.xlane.f32.xlu0 %v870
    %v872 = vpop.xlane.xlu0 %871
    %v873 = vsel %vm577, %v865, 0.0
    %874 = vadd.xlane.f32.xlu0 %v873
    %v875 = vpop.xlane.xlu0 %874
    %v876 = vsel %vm577, %v866, 0.0
    %877 = vadd.xlane.f32.xlu0 %v876
    %v878 = vpop.xlane.xlu0 %877
    %v879 = vstv %s49
    %v880 = vadd.f32 %v869, %v879
    %v881 = vadd.f32 %v872, %v879
    %v882 = vadd.f32 %v875, %v879
    %v883 = vadd.f32 %v878, %v879
    %v884 = vlaneseq
    %v885 = vshrl.u32 %v884, 7
    %v886 = vsub.s32 0, %v885
    %v887 = vrot.slane %v54, %v886
    %v888 = vmul.f32 %v851, %v887
    %v889 = vmul.f32 %v852, %v887
    %v890 = vmul.f32 %v853, %v887
    %v891 = vmul.f32 %v854, %v887
    %v892 = vsel %vm577, %v888, 0.0
    %893 = vadd.xlane.f32.xlu0 %v892
    %v894 = vpop.xlane.xlu0 %893
    %v895 = vsel %vm577, %v889, 0.0
    %896 = vadd.xlane.f32.xlu0 %v895
    %v897 = vpop.xlane.xlu0 %896
    %v898 = vsel %vm577, %v890, 0.0
    %899 = vadd.xlane.f32.xlu0 %v898
    %v900 = vpop.xlane.xlu0 %899
    %v901 = vsel %vm577, %v891, 0.0
    %902 = vadd.xlane.f32.xlu0 %v901
    %v903 = vpop.xlane.xlu0 %902
    %v904 = vmul.f32 %v894, 0.03125
    %v905 = vmul.f32 %v897, 0.03125
    %v906 = vmul.f32 %v900, 0.03125
    %v907 = vmul.f32 %v903, 0.03125
    %v908 = vsub.f32 %v880, %v904
    %v909 = vsub.f32 %v881, %v905
    %v910 = vsub.f32 %v882, %v906
    %v911 = vsub.f32 %v883, %v907
    %v912 = vmul.f32 %v908, 0.125
    %v913 = vmul.f32 %v909, 0.125
    %v914 = vmul.f32 %v910, 0.125
    %v915 = vmul.f32 %v911, 0.125
    %v916 = vmax.f32 %v912, 0.001
    %v917 = vmax.f32 %v913, 0.001
    %v918 = vmax.f32 %v914, 0.001
    %v919 = vmax.f32 %v915, 0.001
    %v920 = vrcp.pop %v916
    %v921 = vmul.f32 1.0, %v920
    %v922 = vrcp.pop %v917
    %v923 = vmul.f32 1.0, %v922
    %v924 = vrcp.pop %v918
    %v925 = vmul.f32 1.0, %v924
    %v926 = vrcp.pop %v919
    %v927 = vmul.f32 1.0, %v926
    %v928 = vsub.f32 %v542, %v580
    %v929 = vsub.f32 %v545, %v583
    %v930 = vsub.f32 %v550, %v586
    %v931 = vsub.f32 %v553, %v589
    %v932 = vmul.f32 %v928, %v921
    %v933 = vmul.f32 %v929, %v923
    %v934 = vmul.f32 %v930, %v925
    %v935 = vmul.f32 %v931, %v927
    %v936 = vsel %vm569, 0.0, %v932
    %v937 = vsel %vm570, 0.0, %v933
    %v938 = vsel %vm571, 0.0, %v934
    %v939 = vsel %vm572, 0.0, %v935
    %v940 = vsel %vm577, %v936, -inf
    %941 = vmax.xlane.f32.xlu0 %v940
    %v942 = vpop.xlane.xlu0 %941
    %v943 = vsel %vm577, %v937, -inf
    %944 = vmax.xlane.f32.xlu0 %v943
    %v945 = vpop.xlane.xlu0 %944
    %v946 = vsel %vm577, %v938, -inf
    %947 = vmax.xlane.f32.xlu0 %v946
    %v948 = vpop.xlane.xlu0 %947
    %v949 = vsel %vm577, %v939, -inf
    %950 = vmax.xlane.f32.xlu0 %v949
    %v951 = vpop.xlane.xlu0 %950
    %v952 = vsub.f32 %v936, %v942
    %v953 = vsub.f32 %v937, %v945
    %v954 = vsub.f32 %v938, %v948
    %v955 = vsub.f32 %v939, %v951
    %v956 = vmul.f32 %v952, 1.442695
    %v957 = vpow.pop %v956
    %v958 = vmul.f32 %v953, 1.442695
    %v959 = vpow.pop %v958
    %v960 = vmul.f32 %v954, 1.442695
    %v961 = vpow.pop %v960
    %v962 = vmul.f32 %v955, 1.442695
    %v963 = vpow.pop %v962
    %v964 = vsel %vm569, 0.0, %v957
    %v965 = vsel %vm570, 0.0, %v959
    %v966 = vsel %vm571, 0.0, %v961
    %v967 = vsel %vm572, 0.0, %v963
    %v968 = vsel %vm577, %v964, 0.0
    %969 = vadd.xlane.f32.xlu0 %v968
    %v970 = vpop.xlane.xlu0 %969
    %v971 = vsel %vm577, %v965, 0.0
    %972 = vadd.xlane.f32.xlu0 %v971
    %v973 = vpop.xlane.xlu0 %972
    %v974 = vsel %vm577, %v966, 0.0
    %975 = vadd.xlane.f32.xlu0 %v974
    %v976 = vpop.xlane.xlu0 %975
    %v977 = vsel %vm577, %v967, 0.0
    %978 = vadd.xlane.f32.xlu0 %v977
    %v979 = vpop.xlane.xlu0 %978
    %v980 = vmul.f32 %v964, %v936
    %v981 = vmul.f32 %v965, %v937
    %v982 = vmul.f32 %v966, %v938
    %v983 = vmul.f32 %v967, %v939
    %v984 = vsel %vm577, %v980, 0.0
    %985 = vadd.xlane.f32.xlu0 %v984
    %v986 = vpop.xlane.xlu0 %985
    %v987 = vsel %vm577, %v981, 0.0
    %988 = vadd.xlane.f32.xlu0 %v987
    %v989 = vpop.xlane.xlu0 %988
    %v990 = vsel %vm577, %v982, 0.0
    %991 = vadd.xlane.f32.xlu0 %v990
    %v992 = vpop.xlane.xlu0 %991
    %v993 = vsel %vm577, %v983, 0.0
    %994 = vadd.xlane.f32.xlu0 %v993
    %v995 = vpop.xlane.xlu0 %994
    %v1000 = vlaneseq
    %v1001 = vshrl.u32 %v1000, 7
    %v1002 = vsub.s32 %v568, %v1001
    %v1003 = vrot.slane %v916, %v1002
    %v1004 = vadd.s32 %v568, 4294967288
    %v1005 = vlaneseq
    %v1006 = vshrl.u32 %v1005, 7
    %v1007 = vsub.s32 %v1004, %v1006
    %v1008 = vrot.slane %v917, %v1007
    %vm1009 = vcmask 130112
    %v1010 = vsel %vm1009, %v1008, %v1003
    %v1011 = vadd.s32 %v568, 4294967280
    %v1012 = vlaneseq
    %v1013 = vshrl.u32 %v1012, 7
    %v1014 = vsub.s32 %v1011, %v1013
    %v1015 = vrot.slane %v918, %v1014
    %vm1016 = vcmask 195712
    %v1017 = vsel %vm1016, %v1015, %v1010
    %v1018 = vadd.s32 %v568, 4294967272
    %v1019 = vlaneseq
    %v1020 = vshrl.u32 %v1019, 7
    %v1021 = vsub.s32 %v1018, %v1020
    %v1022 = vrot.slane %v919, %v1021
    %vm1023 = vcmask 261312
    %v1024 = vsel %vm1023, %v1022, %v1017
    %v1030 = vlaneseq
    %v1031 = vshrl.u32 %v1030, 7
    %v1032 = vsub.s32 %v568, %v1031
    %v1033 = vrot.slane %v942, %v1032
    %v1034 = vlaneseq
    %v1035 = vshrl.u32 %v1034, 7
    %v1036 = vsub.s32 %v1004, %v1035
    %v1037 = vrot.slane %v945, %v1036
    %v1038 = vsel %vm1009, %v1037, %v1033
    %v1039 = vlaneseq
    %v1040 = vshrl.u32 %v1039, 7
    %v1041 = vsub.s32 %v1011, %v1040
    %v1042 = vrot.slane %v948, %v1041
    %v1043 = vsel %vm1016, %v1042, %v1038
    %v1044 = vlaneseq
    %v1045 = vshrl.u32 %v1044, 7
    %v1046 = vsub.s32 %v1018, %v1045
    %v1047 = vrot.slane %v951, %v1046
    %v1048 = vsel %vm1023, %v1047, %v1043
    %v1054 = vlaneseq
    %v1055 = vshrl.u32 %v1054, 7
    %v1056 = vsub.s32 %v568, %v1055
    %v1057 = vrot.slane %v970, %v1056
    %v1058 = vlaneseq
    %v1059 = vshrl.u32 %v1058, 7
    %v1060 = vsub.s32 %v1004, %v1059
    %v1061 = vrot.slane %v973, %v1060
    %v1062 = vsel %vm1009, %v1061, %v1057
    %v1063 = vlaneseq
    %v1064 = vshrl.u32 %v1063, 7
    %v1065 = vsub.s32 %v1011, %v1064
    %v1066 = vrot.slane %v976, %v1065
    %v1067 = vsel %vm1016, %v1066, %v1062
    %v1068 = vlaneseq
    %v1069 = vshrl.u32 %v1068, 7
    %v1070 = vsub.s32 %v1018, %v1069
    %v1071 = vrot.slane %v979, %v1070
    %v1072 = vsel %vm1023, %v1071, %v1067
    %v1078 = vlaneseq
    %v1079 = vshrl.u32 %v1078, 7
    %v1080 = vsub.s32 %v568, %v1079
    %v1081 = vrot.slane %v986, %v1080
    %v1082 = vlaneseq
    %v1083 = vshrl.u32 %v1082, 7
    %v1084 = vsub.s32 %v1004, %v1083
    %v1085 = vrot.slane %v989, %v1084
    %v1086 = vsel %vm1009, %v1085, %v1081
    %v1087 = vlaneseq
    %v1088 = vshrl.u32 %v1087, 7
    %v1089 = vsub.s32 %v1011, %v1088
    %v1090 = vrot.slane %v992, %v1089
    %v1091 = vsel %vm1016, %v1090, %v1086
    %v1092 = vlaneseq
    %v1093 = vshrl.u32 %v1092, 7
    %v1094 = vsub.s32 %v1018, %v1093
    %v1095 = vrot.slane %v995, %v1094
    %v1096 = vsel %vm1023, %v1095, %v1091
    %vm1098 = vcmask 1040384
    %v1099 = vsel %vm1098, %v1024, %v1048
    %vm1100 = vcmask 1041408
    %v1101 = vsel %vm1100, %v1099, %v1072
    %vm1102 = vcmask 1042432
    %v1103 = vsel %vm1102, %v1101, %v1096
    %vm1104 = vcmask 257024
    %1105 = vst.msk [vmem:[%s9] sm:$0xf] %vm1104, %v1103
    %v1106 = vld [vmem:[#allocation2 + $0x1] sm:$0x1]
    %v1107 = vld [vmem:[%s8] sm:$0x1]
    %v1109 = vlaneseq
    %v1110 = vshrl.u32 %v1109, 7
    %v1111 = vsub.s32 0, %v1110
    %v1112 = vrot.slane %v1107, %v1111
    %v1114 = vsub.f32 %v542, %v1112
    %v1115 = vsub.f32 %v545, %v1112
    %v1116 = vsub.f32 %v550, %v1112
    %v1117 = vsub.f32 %v553, %v1112
    %v1118 = vlaneseq
    %v1119 = vshrl.u32 %v1118, 7
    %v1120 = vsub.s32 0, %v1119
    %v1121 = vrot.slane %v1106, %v1120
    %v1122 = vmul.f32 %v1114, %v1121
    %v1123 = vmul.f32 %v1115, %v1121
    %v1124 = vmul.f32 %v1116, %v1121
    %v1125 = vmul.f32 %v1117, %v1121
    %v1126 = vsel %vm569, 0.0, %v1122
    %v1127 = vsel %vm570, 0.0, %v1123
    %v1128 = vsel %vm571, 0.0, %v1124
    %v1129 = vsel %vm572, 0.0, %v1125
    %v1130 = vld [vmem:[#allocation3] sm:$0x1]
    %v1131 = vsel %vm577, %v1126, -inf
    %v1132 = vsel %vm577, %v1127, -inf
    %v1133 = vsel %vm577, %v1128, -inf
    %v1134 = vsel %vm577, %v1129, -inf
    %v1135 = vmax.f32 %v1131, %v1132
    %v1136 = vmax.f32 %v1133, %v1134
    %v1137 = vmax.f32 %v1135, %v1136
    %v1138 = vrot.slane %v1137, 4
    %v1139 = vmax.f32 %v1137, %v1138
    %v1140 = vrot.slane %v1139, 2
    %v1141 = vmax.f32 %v1139, %v1140
    %v1142 = vrot.slane %v1141, 1
    %v1143 = vmax.f32 %v1141, %v1142
    %v1144 = vmax.f32 %v1130, %v1143
    %v1145 = vsub.f32 %v1130, %v1144
    %v1146 = vmul.f32 %v1145, 1.442695
    %v1147 = vpow.pop %v1146
    %v1148 = vlaneseq
    %v1149 = vshrl.u32 %v1148, 7
    %v1150 = vsub.s32 0, %v1149
    %v1151 = vrot.slane %v1144, %v1150
    %v1152 = vsub.f32 %v1126, %v1151
    %v1153 = vsub.f32 %v1127, %v1151
    %v1154 = vsub.f32 %v1128, %v1151
    %v1155 = vsub.f32 %v1129, %v1151
    %v1156 = vmul.f32 %v1152, 1.442695
    %v1157 = vpow.pop %v1156
    %v1158 = vmul.f32 %v1153, 1.442695
    %v1159 = vpow.pop %v1158
    %v1160 = vmul.f32 %v1154, 1.442695
    %v1161 = vpow.pop %v1160
    %v1162 = vmul.f32 %v1155, 1.442695
    %v1163 = vpow.pop %v1162
    %v1164 = vsel %vm569, 0.0, %v1157
    %v1165 = vsel %vm570, 0.0, %v1159
    %v1166 = vsel %vm571, 0.0, %v1161
    %v1167 = vsel %vm572, 0.0, %v1163
    %vm1168 = vcmask 253952
    %1169 = vst.msk [vmem:[#allocation3] sm:$0x1] %vm1168, %v1144
    %v1170 = vld [vmem:[#allocation3 + $0x1] sm:$0x1]
    %v1171 = vmul.f32 %v1170, %v1147
    %v1172 = vsel %vm577, %v1164, 0.0
    %v1173 = vsel %vm577, %v1165, 0.0
    %v1174 = vadd.f32 %v1172, %v1173
    %v1175 = vsel %vm577, %v1166, 0.0
    %v1176 = vadd.f32 %v1174, %v1175
    %v1177 = vsel %vm577, %v1167, 0.0
    %v1178 = vadd.f32 %v1176, %v1177
    %v1179 = vrot.slane %v1178, 4
    %v1180 = vadd.f32 %v1178, %v1179
    %v1181 = vrot.slane %v1180, 2
    %v1182 = vadd.f32 %v1180, %v1181
    %v1183 = vrot.slane %v1182, 1
    %v1184 = vadd.f32 %v1182, %v1183
    %v1185 = vadd.f32 %v1171, %v1184
    %1186 = vst.msk [vmem:[#allocation3 + $0x1] sm:$0x1] %vm1168, %v1185
    %v1187 = vld [vmem:[#allocation3 + $0x2] sm:$0x1]
    %v1188 = vmul.f32 %v1187, %v1147
    %v1189 = vmul.f32 %v1164, %v1126
    %v1190 = vmul.f32 %v1165, %v1127
    %v1191 = vmul.f32 %v1166, %v1128
    %v1192 = vmul.f32 %v1167, %v1129
    %v1193 = vsel %vm577, %v1189, 0.0
    %v1194 = vsel %vm577, %v1190, 0.0
    %v1195 = vadd.f32 %v1193, %v1194
    %v1196 = vsel %vm577, %v1191, 0.0
    %v1197 = vadd.f32 %v1195, %v1196
    %v1198 = vsel %vm577, %v1192, 0.0
    %v1199 = vadd.f32 %v1197, %v1198
    %v1200 = vrot.slane %v1199, 4
    %v1201 = vadd.f32 %v1199, %v1200
    %v1202 = vrot.slane %v1201, 2
    %v1203 = vadd.f32 %v1201, %v1202
    %v1204 = vrot.slane %v1203, 1
    %v1205 = vadd.f32 %v1203, %v1204
    %v1206 = vadd.f32 %v1188, %v1205
    %1207 = vst.msk [vmem:[#allocation3 + $0x2] sm:$0x1] %vm1168, %v1206
    // Predicated region
    $region46: #{isogclr_tempnet_loss.1} parent=1 // pred_check
      %p1208 = pneg %p66
    $region47: #{isogclr_tempnet_loss.1} parent=1 // pred_check_branch
      %1210 = sbr.rel (%p1208) target = $region49
    $region48: #{isogclr_tempnet_loss.1} parent=1 // pred_region
      %v1211 = vld [vmem:[#allocation2] sm:$0x1]
      %v1212 = vld [vmem:[#allocation3] sm:$0x1]
      %v1213 = vld [vmem:[#allocation3 + $0x1] sm:$0x1]
      %v1214 = vld [vmem:[#allocation3 + $0x2] sm:$0x1]
      %v1216 = vrot.slane %v1212, 7
      %v1219 = vrot.slane %v1213, 6
      %v1222 = vrot.slane %v1214, 5
      %v1224 = vsel %vm1098, %v1211, %v1216
      %v1225 = vsel %vm1100, %v1224, %v1219
      %v1226 = vsel %vm1102, %v1225, %v1222
      %1227 = vst.msk [vmem:[%s10] sm:$0xf] %vm1104, %v1226
    $region49: #{isogclr_tempnet_loss.1} parent=1 // pred_fallthru
      _
    // Predicated region
    $region50: #{isogclr_tempnet_loss.1} parent=1 // pred_check
      _
    $region51: #{isogclr_tempnet_loss.1} parent=1 // pred_check_branch
      %1229 = sbr.rel (0) target = $region53
    $region52: #{isogclr_tempnet_loss.1} parent=1 // pred_region
      _
    $region53: #{isogclr_tempnet_loss.1} parent=1 // pred_fallthru
      _
    // Predicated region
    $region54: #{isogclr_tempnet_loss.1} parent=1 // pred_check
      _
    $region55: #{isogclr_tempnet_loss.1} parent=1 // pred_check_branch
      %1231 = sbr.rel (0) target = $region57
    $region56: #{isogclr_tempnet_loss.1} parent=1 // pred_region
      _
    $region57: #{isogclr_tempnet_loss.1} parent=1 // pred_fallthru
      _
    // Predicated region
    $region58: #{isogclr_tempnet_loss.1} parent=1 // pred_check
      _
    $region59: #{isogclr_tempnet_loss.1} parent=1 // pred_check_branch
      %1233 = sbr.rel (0) target = $region61
    $region60: #{isogclr_tempnet_loss.1} parent=1 // pred_region
      _
    $region61: #{isogclr_tempnet_loss.1} parent=1 // pred_fallthru
      _
    // Predicated region
    $region62: #{isogclr_tempnet_loss.1} parent=1 // pred_check
      _
    $region63: #{isogclr_tempnet_loss.1} parent=1 // pred_check_branch
      %1235 = sbr.rel (0) target = $region65
    $region64: #{isogclr_tempnet_loss.1} parent=1 // pred_region
      _
    $region65: #{isogclr_tempnet_loss.1} parent=1 // pred_fallthru
      _
    %1236 = vsyncpa [#allocation5], 1

</llo_original>
